<compile_context>
chip_gen: v7x
topology: tpu7x:2x2x1
jax: 0.10.0
libtpu: 0.0.40
codegen_flags: <defaults>
</compile_context>

<pallas_src>
import functools
import math

import jax
import jax.numpy as jnp
from jax import lax
from jax.experimental import pallas as pl
from jax.experimental.pallas import tpu as pltpu


def _round_up(x, m):
    return ((x + m - 1) // m) * m


def _device_defaults():
    """Pick (tq, tk, vmem_cap_bytes) per TPU generation; fallback is safe everywhere."""
    vmem_bytes = None
    try:
        vmem_bytes = int(pltpu.get_tpu_info().vmem_capacity_bytes)
    except Exception:
        vmem_bytes = None
    if vmem_bytes is not None and vmem_bytes >= 96 * 2 ** 20:
        # v5e / v6e: 128 MiB VMEM -> big query tiles, fat k-steps, generous scoped-VMEM cap.
        return 512, 256, 112 * 2 ** 20
    # v7x (64 MiB per TensorCore) or unknown backend: moderate tiles, leave headroom.
    return 256, 256, 48 * 2 ** 20


def _buffered_spec(shape, index_map, buffer_count):
    """BlockSpec with an explicit buffer count; fall back silently if unsupported."""
    try:
        return pl.BlockSpec(shape, index_map, pipeline_mode=pl.Buffered(buffer_count))
    except Exception:
        return pl.BlockSpec(shape, index_map)


def _sdpa_kernel(q_ref, k_ref, v_ref, mb_ref, w_ref, b_ref, o_ref,
                 m_sc, l_sc, acc_sc, *, needs_mask):
    ki = pl.program_id(2)

    @pl.when(ki == 0)
    def _init():
        m_sc[...] = jnp.full_like(m_sc, -jnp.inf)
        l_sc[...] = jnp.zeros_like(l_sc)
        acc_sc[...] = jnp.zeros_like(acc_sc)

    q = q_ref[0]                     # (tq, dk_p), compute dtype, pre-scaled by 1/sqrt(d_k)
    k = k_ref[0]                     # (tk, dk_p)
    v = v_ref[0]                     # (tk, dv_p)

    # q @ k^T without an in-kernel transpose; f32 accumulation on the MXU.
    s = lax.dot_general(q, k, (((1,), (1,)), ((), ())),
                        preferred_element_type=jnp.float32)          # (tq, tk) f32

    if needs_mask:
        # Additive key-padding bias (0 for valid keys, -1e30 for padded keys).
        s = s + mb_ref[...]

    # Online softmax update (stats kept in f32).
    m_prev = m_sc[...]
    m_new = jnp.maximum(m_prev, jnp.max(s, axis=-1, keepdims=True))
    alpha = jnp.exp(m_prev - m_new)
    p = jnp.exp(s - m_new)                                           # (tq, tk) f32
    l_sc[...] = alpha * l_sc[...] + jnp.sum(p, axis=-1, keepdims=True)
    acc_sc[...] = alpha * acc_sc[...] + jnp.dot(
        p.astype(v.dtype), v, preferred_element_type=jnp.float32)
    m_sc[...] = m_new

    @pl.when(ki == pl.num_programs(2) - 1)
    def _finalize():
        # Exact reciprocal: approx=True loses ~1e-3 relative accuracy that the FC amplifies.
        ctx = acc_sc[...] * pl.reciprocal(l_sc[...], approx=False)   # (tq, dv_p) f32
        # fc: y = ctx @ W^T + b ; W was pre-transposed in the wrapper -> plain dot.
        out = jnp.dot(ctx.astype(w_ref.dtype), w_ref[...],
                      preferred_element_type=jnp.float32)            # (tq, dm_p) f32
        out = out + b_ref[...]
        o_ref[0] = out.astype(o_ref.dtype)


def scaled_dot_product_attention(q, k, v, fc_weight, fc_bias, d_k, *,
                                 tq=None, tk=None,
                                 compute_dtype=jnp.bfloat16,
                                 vmem_cap_bytes=None):
    """q: (B, Lq, d_k), k: (B, Lk, d_k), v: (B, Lk, d_v)
       fc_weight: (d_model, d_v), fc_bias: (d_model,)  ->  (B, Lq, d_model)"""
    B, Lq, dk = q.shape
    _, Lk, _ = k.shape
    d_v = v.shape[-1]
    d_model = fc_weight.shape[0]

    tq_def, tk_def, cap_def = _device_defaults()
    if tq is None:
        tq = tq_def
    if tk is None:
        tk = tk_def
    if vmem_cap_bytes is None:
        vmem_cap_bytes = cap_def

    # Pad feature dims to full 128-lane width; clamp tiles for short sequences.
    dk_p = _round_up(dk, 128)
    dv_p = _round_up(d_v, 128)
    dm_p = _round_up(d_model, 128)
    tq = min(tq, _round_up(Lq, 128))
    tk = min(tk, _round_up(Lk, 128))
    Lq_p = _round_up(Lq, tq)
    Lk_p = _round_up(Lk, tk)

    scale = 1.0 / math.sqrt(float(d_k))

    # Pre-scale q by 1/sqrt(d_k) once (fused with the padding copy, in f32), then cast
    # everything that feeds the MXU to the compute dtype (bf16 by default, f32 accumulate).
    qp = jnp.pad(q.astype(jnp.float32) * scale,
                 ((0, 0), (0, Lq_p - Lq), (0, dk_p - dk))).astype(compute_dtype)
    kp = jnp.pad(k, ((0, 0), (0, Lk_p - Lk), (0, dk_p - dk))).astype(compute_dtype)
    vp = jnp.pad(v, ((0, 0), (0, Lk_p - Lk), (0, dv_p - d_v))).astype(compute_dtype)

    # FC weight pre-transposed once so the kernel does a plain (d_v, d_model) dot.
    w_t = jnp.pad(fc_weight.T,
                  ((0, dv_p - d_v), (0, dm_p - d_model))).astype(compute_dtype)
    b2 = jnp.pad(fc_bias.astype(jnp.float32).reshape(1, d_model),
                 ((0, 0), (0, dm_p - d_model)))

    # Additive key-padding bias: 0 for valid keys, -1e30 for padded keys.
    needs_mask = (Lk_p != Lk)
    key_ids = jnp.arange(Lk_p, dtype=jnp.int32)
    mask_bias = jnp.where(key_ids < Lk, 0.0, -1e30).astype(jnp.float32).reshape(1, Lk_p)

    kernel = functools.partial(_sdpa_kernel, needs_mask=needs_mask)
    grid = (B, Lq_p // tq, Lk_p // tk)

    # Honest VMEM budget: double-buffered q/k/v/out blocks, SINGLE-buffered resident
    # FC weight & bias, plus the f32 scratch accumulators.
    cd_size = jnp.dtype(compute_dtype).itemsize
    out_size = jnp.dtype(q.dtype).itemsize
    vmem_need = (
        2 * (tq * dk_p + tk * dk_p + tk * dv_p) * cd_size   # q / k / v blocks (x2 buffers)
        + 2 * tk * 4                                        # mask-bias rows
        + dv_p * dm_p * cd_size + dm_p * 4                  # resident FC weight / bias (x1)
        + 2 * tq * dm_p * out_size                          # output block (x2 buffers)
        + (2 * tq + tq * dv_p) * 4                          # f32 scratch
    )
    vmem_limit = int(min(max(2 * vmem_need, 32 * 2 ** 20), vmem_cap_bytes))

    out_p = pl.pallas_call(
        kernel,
        out_shape=jax.ShapeDtypeStruct((B, Lq_p, dm_p), q.dtype),
        grid_spec=pltpu.PrefetchScalarGridSpec(
            num_scalar_prefetch=0,
            grid=grid,
            in_specs=[
                pl.BlockSpec((1, tq, dk_p), lambda b, qi, ki: (b, qi, 0)),
                pl.BlockSpec((1, tk, dk_p), lambda b, qi, ki: (b, ki, 0)),
                pl.BlockSpec((1, tk, dv_p), lambda b, qi, ki: (b, ki, 0)),
                pl.BlockSpec((1, tk), lambda b, qi, ki: (0, ki)),
                _buffered_spec((dv_p, dm_p), lambda b, qi, ki: (0, 0), 1),
                _buffered_spec((1, dm_p), lambda b, qi, ki: (0, 0), 1),
            ],
            out_specs=pl.BlockSpec((1, tq, dm_p), lambda b, qi, ki: (b, qi, 0)),
            scratch_shapes=[
                pltpu.VMEM((tq, 1), jnp.float32),      # running max
                pltpu.VMEM((tq, 1), jnp.float32),      # running sum
                pltpu.VMEM((tq, dv_p), jnp.float32),   # output accumulator
            ],
        ),
        compiler_params=pltpu.CompilerParams(
            dimension_semantics=("parallel", "parallel", "arbitrary"),
            vmem_limit_bytes=vmem_limit,
        ),
    )(qp, kp, vp, mask_bias, w_t, b2)

    return out_p[:, :Lq, :d_model]


def _reference(q, k, v, fc_weight, fc_bias, d_k):
    scale = 1.0 / jnp.sqrt(jnp.asarray(d_k, dtype=jnp.float32))
    attn = jnp.einsum("bqd,bkd->bqk", q, k) * scale
    attn = jax.nn.softmax(attn, axis=-1)
    out = jnp.einsum("bqk,bkv->bqv", attn, v)
    return out @ fc_weight.T + fc_bias


if __name__ == "__main__":
    # Small, module-consistent shapes.
    B, Lq, Lk = 2, 8, 8
    d_k, d_v, d_model = 32, 32, 32

    key = jax.random.PRNGKey(0)
    kq, kk, kv, kw, kb = jax.random.split(key, 5)

    q = jax.random.normal(kq, (B, Lq, d_k), dtype=jnp.float32)
    k = jax.random.normal(kk, (B, Lk, d_k), dtype=jnp.float32)
    v = jax.random.normal(kv, (B, Lk, d_v), dtype=jnp.float32)

    # Deterministic synthetic Linear(d_v, d_model) params (PyTorch layout: W (d_model, d_v)).
    fc_weight = jax.random.normal(kw, (d_model, d_v), dtype=jnp.float32) * 0.1
    fc_bias = jax.random.normal(kb, (d_model,), dtype=jnp.float32) * 0.1

    ref = _reference(q, k, v, fc_weight, fc_bias, d_k)

    # 1) Exact f32 compute path: tight tolerance (this is the check that failed before).
    out_f32 = scaled_dot_product_attention(q, k, v, fc_weight, fc_bias, d_k,
                                           compute_dtype=jnp.float32)
    out_f32 = jax.block_until_ready(out_f32)
    assert out_f32.shape == (B, Lq, d_model)
    assert jnp.allclose(out_f32, ref, atol=1e-4, rtol=1e-4), "f32 path mismatch vs reference"

    # 2) Default fast path: bf16 MXU matmuls with f32 accumulation (bf16-level tolerance).
    out_bf16 = scaled_dot_product_attention(q, k, v, fc_weight, fc_bias, d_k)
    out_bf16 = jax.block_until_ready(out_bf16)
    assert out_bf16.shape == (B, Lq, d_model)
    assert jnp.allclose(out_bf16, ref, atol=5e-2, rtol=5e-2), "bf16 path mismatch vs reference"

    print("KERNEL_OK")
</pallas_src>

<mosaic_0001>
module attributes {stable_mosaic.version = 11 : i64} {
  func.func @_sdpa_kernel(%arg0: i32, %arg1: i32, %arg2: i32, %arg3: memref<1x128x128xf32, #tpu.memory_space<vmem>>, %arg4: memref<1x128x128xf32, #tpu.memory_space<vmem>>, %arg5: memref<1x128x128xf32, #tpu.memory_space<vmem>>, %arg6: memref<1x128xf32, #tpu.memory_space<vmem>>, %arg7: memref<128x128xf32, #tpu.memory_space<vmem>>, %arg8: memref<1x128xf32, #tpu.memory_space<vmem>>, %arg9: memref<1x128x128xf32, #tpu.memory_space<vmem>>, %arg10: memref<128x1xf32, #tpu.memory_space<vmem>>, %arg11: memref<128x1xf32, #tpu.memory_space<vmem>>, %arg12: memref<128x128xf32, #tpu.memory_space<vmem>>) attributes {dimension_semantics = [#tpu.dimension_semantics<parallel>, #tpu.dimension_semantics<parallel>, #tpu.dimension_semantics<arbitrary>], iteration_bounds = array<i64: 2, 1, 1>, scalar_prefetch = 0 : i64, scratch_operands = 3 : i64, tpu.core_type = #tpu.core_type<tc>, window_params = [{transform_indices = @transform_0, window_bounds = array<i64: 1, 128, 128>}, {transform_indices = @transform_1, window_bounds = array<i64: 1, 128, 128>}, {transform_indices = @transform_2, window_bounds = array<i64: 1, 128, 128>}, {transform_indices = @transform_3, window_bounds = array<i64: 1, 128>}, {pipeline_mode = #tpu.pipeline_mode<synchronous>, transform_indices = @transform_4, window_bounds = array<i64: 128, 128>}, {pipeline_mode = #tpu.pipeline_mode<synchronous>, transform_indices = @transform_5, window_bounds = array<i64: 1, 128>}, {transform_indices = @transform_6, window_bounds = array<i64: 1, 128, 128>}]} {
    %c0_i32 = arith.constant 0 : i32
    %0 = arith.cmpi eq, %arg2, %c0_i32 : i32
    %1 = arith.extui %0 : i1 to i32
    %c0_i32_0 = arith.constant 0 : i32
    %2 = arith.cmpi ne, %1, %c0_i32_0 : i32
    scf.if %2 {
      %cst_28 = arith.constant 0xFF800000 : f32
      %38 = vector.broadcast %cst_28 : f32 to vector<128x1xf32>
      %c0_29 = arith.constant 0 : index
      %c0_30 = arith.constant 0 : index
      %39 = vector.load %arg10[%c0_29, %c0_30] : memref<128x1xf32, #tpu.memory_space<vmem>>, vector<128x1xf32>
      tpu.vector_store %arg10[%c0_29, %c0_30], %38 {strides = array<i32>} : memref<128x1xf32, #tpu.memory_space<vmem>>, vector<128x1xf32>,
      %cst_31 = arith.constant 0.000000e+00 : f32
      %40 = vector.broadcast %cst_31 : f32 to vector<128x1xf32>
      %c0_32 = arith.constant 0 : index
      %c0_33 = arith.constant 0 : index
      %41 = vector.load %arg11[%c0_32, %c0_33] : memref<128x1xf32, #tpu.memory_space<vmem>>, vector<128x1xf32>
      tpu.vector_store %arg11[%c0_32, %c0_33], %40 {strides = array<i32>} : memref<128x1xf32, #tpu.memory_space<vmem>>, vector<128x1xf32>,
      %cst_34 = arith.constant 0.000000e+00 : f32
      %42 = vector.broadcast %cst_34 : f32 to vector<128x128xf32>
      %c0_35 = arith.constant 0 : index
      %c0_36 = arith.constant 0 : index
      %43 = vector.load %arg12[%c0_35, %c0_36] : memref<128x128xf32, #tpu.memory_space<vmem>>, vector<128x128xf32>
      tpu.vector_store %arg12[%c0_35, %c0_36], %42 {strides = array<i32>} : memref<128x128xf32, #tpu.memory_space<vmem>>, vector<128x128xf32>,
    } else {
    }
    %c0 = arith.constant 0 : index
    %c0_1 = arith.constant 0 : index
    %c0_2 = arith.constant 0 : index
    %3 = vector.load %arg3[%c0, %c0_1, %c0_2] : memref<1x128x128xf32, #tpu.memory_space<vmem>>, vector<1x128x128xf32>
    %4 = vector.shape_cast %3 : vector<1x128x128xf32> to vector<128x128xf32>
    %c0_3 = arith.constant 0 : index
    %c0_4 = arith.constant 0 : index
    %c0_5 = arith.constant 0 : index
    %5 = vector.load %arg4[%c0_3, %c0_4, %c0_5] : memref<1x128x128xf32, #tpu.memory_space<vmem>>, vector<1x128x128xf32>
    %6 = vector.shape_cast %5 : vector<1x128x128xf32> to vector<128x128xf32>
    %c0_6 = arith.constant 0 : index
    %c0_7 = arith.constant 0 : index
    %c0_8 = arith.constant 0 : index
    %7 = vector.load %arg5[%c0_6, %c0_7, %c0_8] : memref<1x128x128xf32, #tpu.memory_space<vmem>>, vector<1x128x128xf32>
    %8 = vector.shape_cast %7 : vector<1x128x128xf32> to vector<128x128xf32>
    %cst = arith.constant dense<0.000000e+00> : vector<128x128xf32>
    %9 = tpu.matmul %4, %6, %cst {dimension_numbers = #tpu.dot_dimension_numbers<[1], [1], [0], [0], [0, 0, 1, 0], [], []>} : vector<128x128xf32>, vector<128x128xf32>, vector<128x128xf32> -> vector<128x128xf32>
    %c0_9 = arith.constant 0 : index
    %c0_10 = arith.constant 0 : index
    %10 = vector.load %arg6[%c0_9, %c0_10] : memref<1x128xf32, #tpu.memory_space<vmem>>, vector<1x128xf32>
    %11 = vector.broadcast %10 : vector<1x128xf32> to vector<128x128xf32>
    %12 = arith.addf %9, %11 : vector<128x128xf32>
    %c0_11 = arith.constant 0 : index
    %c0_12 = arith.constant 0 : index
    %13 = vector.load %arg10[%c0_11, %c0_12] : memref<128x1xf32, #tpu.memory_space<vmem>>, vector<128x1xf32>
    %cst_13 = arith.constant dense<0xFF800000> : vector<128xf32>
    %14 = vector.multi_reduction <maximumf>, %12, %cst_13 [1] : vector<128x128xf32> to vector<128xf32>
    %15 = vector.shape_cast %14 : vector<128xf32> to vector<128x1xf32>
    %16 = arith.maximumf %13, %15 : vector<128x1xf32>
    %17 = arith.subf %13, %16 : vector<128x1xf32>
    %18 = math.exp %17 : vector<128x1xf32>
    %19 = vector.broadcast %16 : vector<128x1xf32> to vector<128x128xf32>
    %20 = arith.subf %12, %19 : vector<128x128xf32>
    %21 = math.exp %20 : vector<128x128xf32>
    %c0_14 = arith.constant 0 : index
    %c0_15 = arith.constant 0 : index
    %22 = vector.load %arg11[%c0_14, %c0_15] : memref<128x1xf32, #tpu.memory_space<vmem>>, vector<128x1xf32>
    %23 = arith.mulf %18, %22 : vector<128x1xf32>
    %cst_16 = arith.constant dense<0.000000e+00> : vector<128xf32>
    %24 = vector.multi_reduction <add>, %21, %cst_16 [1] : vector<128x128xf32> to vector<128xf32>
    %25 = vector.shape_cast %24 : vector<128xf32> to vector<128x1xf32>
    %26 = arith.addf %23, %25 : vector<128x1xf32>
    %c0_17 = arith.constant 0 : index
    %c0_18 = arith.constant 0 : index
    %27 = vector.load %arg11[%c0_17, %c0_18] : memref<128x1xf32, #tpu.memory_space<vmem>>, vector<128x1xf32>
    tpu.vector_store %arg11[%c0_17, %c0_18], %26 {strides = array<i32>} : memref<128x1xf32, #tpu.memory_space<vmem>>, vector<128x1xf32>,
    %c0_19 = arith.constant 0 : index
    %c0_20 = arith.constant 0 : index
    %28 = vector.load %arg12[%c0_19, %c0_20] : memref<128x128xf32, #tpu.memory_space<vmem>>, vector<128x128xf32>
    %29 = vector.broadcast %18 : vector<128x1xf32> to vector<128x128xf32>
    %30 = arith.mulf %29, %28 : vector<128x128xf32>
    %cst_21 = arith.constant dense<0.000000e+00> : vector<128x128xf32>
    %31 = tpu.matmul %21, %8, %cst_21 {dimension_numbers = #tpu.dot_dimension_numbers<[1], [0], [0], [1], [0, 0, 1, 1], [], []>} : vector<128x128xf32>, vector<128x128xf32>, vector<128x128xf32> -> vector<128x128xf32>
    %32 = arith.addf %30, %31 : vector<128x128xf32>
    %c0_22 = arith.constant 0 : index
    %c0_23 = arith.constant 0 : index
    %33 = vector.load %arg12[%c0_22, %c0_23] : memref<128x128xf32, #tpu.memory_space<vmem>>, vector<128x128xf32>
    tpu.vector_store %arg12[%c0_22, %c0_23], %32 {strides = array<i32>} : memref<128x128xf32, #tpu.memory_space<vmem>>, vector<128x128xf32>,
    %c0_24 = arith.constant 0 : index
    %c0_25 = arith.constant 0 : index
    %34 = vector.load %arg10[%c0_24, %c0_25] : memref<128x1xf32, #tpu.memory_space<vmem>>, vector<128x1xf32>
    tpu.vector_store %arg10[%c0_24, %c0_25], %16 {strides = array<i32>} : memref<128x1xf32, #tpu.memory_space<vmem>>, vector<128x1xf32>,
    %c0_i32_26 = arith.constant 0 : i32
    %35 = arith.cmpi eq, %arg2, %c0_i32_26 : i32
    %36 = arith.extui %35 : i1 to i32
    %c0_i32_27 = arith.constant 0 : i32
    %37 = arith.cmpi ne, %36, %c0_i32_27 : i32
    scf.if %37 {
      %c0_28 = arith.constant 0 : index
      %c0_29 = arith.constant 0 : index
      %38 = vector.load %arg12[%c0_28, %c0_29] : memref<128x128xf32, #tpu.memory_space<vmem>>, vector<128x128xf32>
      %c0_30 = arith.constant 0 : index
      %c0_31 = arith.constant 0 : index
      %39 = vector.load %arg11[%c0_30, %c0_31] : memref<128x1xf32, #tpu.memory_space<vmem>>, vector<128x1xf32>
      %40 = tpu.reciprocal %39 : vector<128x1xf32> -> vector<128x1xf32>
      %41 = vector.broadcast %40 : vector<128x1xf32> to vector<128x128xf32>
      %42 = arith.mulf %38, %41 : vector<128x128xf32>
      %c0_32 = arith.constant 0 : index
      %c0_33 = arith.constant 0 : index
      %43 = vector.load %arg7[%c0_32, %c0_33] : memref<128x128xf32, #tpu.memory_space<vmem>>, vector<128x128xf32>
      %cst_34 = arith.constant dense<0.000000e+00> : vector<128x128xf32>
      %44 = tpu.matmul %42, %43, %cst_34 {dimension_numbers = #tpu.dot_dimension_numbers<[1], [0], [0], [1], [0, 0, 1, 1], [], []>} : vector<128x128xf32>, vector<128x128xf32>, vector<128x128xf32> -> vector<128x128xf32>
      %c0_35 = arith.constant 0 : index
      %c0_36 = arith.constant 0 : index
      %45 = vector.load %arg8[%c0_35, %c0_36] : memref<1x128xf32, #tpu.memory_space<vmem>>, vector<1x128xf32>
      %46 = vector.broadcast %45 : vector<1x128xf32> to vector<128x128xf32>
      %47 = arith.addf %44, %46 : vector<128x128xf32>
      %c0_37 = arith.constant 0 : index
      %c0_38 = arith.constant 0 : index
      %c0_39 = arith.constant 0 : index
      %48 = vector.load %arg9[%c0_37, %c0_38, %c0_39] : memref<1x128x128xf32, #tpu.memory_space<vmem>>, vector<1x128x128xf32>
      %49 = vector.shape_cast %48 : vector<1x128x128xf32> to vector<128x128xf32>
      %50 = vector.shape_cast %47 : vector<128x128xf32> to vector<1x128x128xf32>
      tpu.vector_store %arg9[%c0_37, %c0_38, %c0_39], %50 {strides = array<i32>} : memref<1x128x128xf32, #tpu.memory_space<vmem>>, vector<1x128x128xf32>,
    } else {
    }
    return
  }
  func.func @transform_0(%arg0: i32, %arg1: i32, %arg2: i32) -> (i32, i32, i32) {
    %c0_i32 = arith.constant 0 : i32
    %c0_i32_0 = arith.constant 0 : i32
    return %arg0, %arg1, %c0_i32 : i32, i32, i32
  }
  func.func @transform_1(%arg0: i32, %arg1: i32, %arg2: i32) -> (i32, i32, i32) {
    %c0_i32 = arith.constant 0 : i32
    %c0_i32_0 = arith.constant 0 : i32
    return %arg0, %arg2, %c0_i32 : i32, i32, i32
  }
  func.func @transform_2(%arg0: i32, %arg1: i32, %arg2: i32) -> (i32, i32, i32) {
    %c0_i32 = arith.constant 0 : i32
    %c0_i32_0 = arith.constant 0 : i32
    return %arg0, %arg2, %c0_i32 : i32, i32, i32
  }
  func.func @transform_3(%arg0: i32, %arg1: i32, %arg2: i32) -> (i32, i32) {
    %c0_i32 = arith.constant 0 : i32
    %c0_i32_0 = arith.constant 0 : i32
    return %c0_i32, %arg2 : i32, i32
  }
  func.func @transform_4(%arg0: i32, %arg1: i32, %arg2: i32) -> (i32, i32) {
    %c0_i32 = arith.constant 0 : i32
    %c0_i32_0 = arith.constant 0 : i32
    %c0_i32_1 = arith.constant 0 : i32
    return %c0_i32, %c0_i32_0 : i32, i32
  }
  func.func @transform_5(%arg0: i32, %arg1: i32, %arg2: i32) -> (i32, i32) {
    %c0_i32 = arith.constant 0 : i32
    %c0_i32_0 = arith.constant 0 : i32
    %c0_i32_1 = arith.constant 0 : i32
    return %c0_i32, %c0_i32_0 : i32, i32
  }
  func.func @transform_6(%arg0: i32, %arg1: i32, %arg2: i32) -> (i32, i32, i32) {
    %c0_i32 = arith.constant 0 : i32
    %c0_i32_0 = arith.constant 0 : i32
    return %arg0, %arg1, %c0_i32 : i32, i32, i32
  }
}

</mosaic_0001>

<llo_original>
// kernel: tpu_custom_call.1
$region0: #{tpu_custom_call.1}
  #allocation0 [shape = 'u32[]', space=smem, size = 0x4, offset = 0x4, fixed_abs, tag = 'smem constant byte address 0x4 - core index']
  #allocation1 [shape = 'u32[144,128]{1,0:T(1,128)}', space=vmem, size = 0x12000, scoped, tag = 'internal scratch']
  #allocation2 [shape = 'f32[128,1]{1,0:T(8,128)}', space=vmem, size = 0x10000, scoped, tag = 'scratch operand']
  #allocation3 [shape = 'f32[128,1]{1,0:T(8,128)}', space=vmem, size = 0x10000, scoped, tag = 'scratch operand']
  #allocation4 [shape = 'f32[128,128]{1,0:T(8,128)}', space=vmem, size = 0x10000, scoped, tag = 'scratch operand']
  %s0 = inlined_call_operand.hbm [shape: f32[2,128,128], index: 0, kind: input, shape index: {}]
  %s1 = inlined_call_operand.hbm [shape: f32[2,128,128], index: 1, kind: input, shape index: {}]
  %s2 = inlined_call_operand.hbm [shape: f32[2,128,128], index: 2, kind: input, shape index: {}]
  %s3 = inlined_call_operand.vmem [shape: f32[1,128], index: 3, kind: input, shape index: {}]
  %s4 = inlined_call_operand.hbm [shape: f32[128,128], index: 4, kind: input, shape index: {}]
  %s5 = inlined_call_operand.vmem [shape: f32[1,128], index: 5, kind: input, shape index: {}]
  %s6 = inlined_call_operand.hbm [shape: f32[2,128,128], index: 6, kind: output, shape index: {}]
  %s7 = sld [smem:[#allocation0]]
  $region81: #{tpu_custom_call.1} parent=0
    _
  %s9 = ssub.s32 1, %s7
  %s10 = scalar_select 0, %s9, %s7
  $region1: #{tpu_custom_call.1} parent=0
    #allocation5 [shape = 'u8[131072]{0}', space=vmem, size = 0x20000, scoped, tag = 'input window, operand 0']
    #allocation6 [shape = 's32[2]{0}', space=sflag, size = 0x8, scoped, tag = 'scoped memory for tpu_custom_call.1']
    #allocation7 [shape = 's32[2]{0}', space=sflag, size = 0x8, scoped, tag = 'scoped memory for tpu_custom_call.1']
    #allocation8 [shape = 'u8[131072]{0}', space=vmem, size = 0x20000, scoped, tag = 'input window, operand 1']
    #allocation9 [shape = 's32[2]{0}', space=sflag, size = 0x8, scoped, tag = 'scoped memory for tpu_custom_call.1']
    #allocation10 [shape = 'u8[131072]{0}', space=vmem, size = 0x20000, scoped, tag = 'input window, operand 2']
    #allocation11 [shape = 'u8[65536]{0}', space=vmem, size = 0x10000, scoped, tag = 'input window, operand 4, single buffered']
    #allocation12 [shape = 's32[1]{0}', space=sflag, size = 0x4, scoped, tag = 'scoped memory for tpu_custom_call.1']
    #allocation13 [shape = 'u8[131072]{0}', space=vmem, size = 0x20000, scoped, tag = 'output window, operand 0']
    %11 = vsyncpa [#allocation6], 0
    %s12 = scalar_lea.sflag [#allocation6], 1
    %13 = vsyncpa %s12, 0
    %14 = vsyncpa [#allocation9], 0
    %s15 = scalar_lea.sflag [#allocation9], 1
    %16 = vsyncpa %s15, 0
    %17 = vsyncpa [#allocation12], 0
    %18 = vsyncpa [#allocation7], 0
    %s19 = scalar_lea.sflag [#allocation7], 1
    %20 = vsyncpa %s19, 0
    loop: start=0, step=1, limit=4
    $region2: #{tpu_custom_call.1} parent=1 // loop_pre_header
      _
    $region3: #{tpu_custom_call.1} parent=1 // loop_header
      %s22 = sphi 0, %s26
      %p23 = scmp.ge.s32.totalorder %s22, 4
      %s29 = sphi 0, %s48
      %s30 = sphi 0, %s44
      %s31 = sphi 0, %s40
      %s32 = sphi 0, %s29
      %s33 = sphi 0, %s30
      %s34 = sphi 0, %s31
      %s35 = sphi 0, %s32
      %s36 = sphi 0, %s33
      %s37 = sphi 0, %s34
      %s53 = sphi 0, %s55
      %s56 = sphi 0, %s53
      %s57 = sphi 0, %s56
      %s73 = sphi 0, %s57
      %s81 = sphi 0, %s83
      %s84 = sphi 0, %s81
      %s85 = sphi 0, %s84
      %s101 = sphi 0, %s85
      %s109 = sphi 0, %s111
      %s112 = sphi 0, %s109
      %s113 = sphi 0, %s112
      %s129 = sphi 0, %s113
      %s135 = sphi 0, %s137
      %s138 = sphi 0, %s135
      %s139 = sphi 0, %s138
      %s155 = sphi 0, %s139
      %s159 = sphi 0, %s159
      %s161 = sphi 0, %s159
      %s162 = sphi 0, %s161
      %s176 = sphi 0, %s162
      %s180 = sphi 0, %s180
      %s182 = sphi 0, %s180
      %s183 = sphi 0, %s182
      %s197 = sphi 0, %s183
      %s205 = sphi 0, %s207
      %s208 = sphi 0, %s205
      %s209 = sphi 0, %s208
      %s225 = sphi 0, %s209
    $region4: #{tpu_custom_call.1} parent=1 // loop_header_branch
      %25 = sbr.rel (%p23) target = $region8
    $region5: #{tpu_custom_call.1} parent=1 // loop_body
      %s27 = ssub.s32 %s22, 1
      %s28 = ssub.s32 %s22, 2
      %s38 = sadd.s32 1, %s31
      %p39 = scmp.ge.s32.totalorder %s38, 1
      %s40 = scalar_select %p39, 0, %s38
      %s41 = sadd.s32 1, %s30
      %s42 = scalar_select %p39, %s41, %s30
      %p43 = scmp.ge.s32.totalorder %s42, 1
      %s44 = scalar_select %p43, 0, %s42
      %s45 = sadd.s32 1, %s29
      %s46 = scalar_select %p43, %s45, %s29
      %p47 = scmp.ge.s32.totalorder %s46, 2
      %s48 = scalar_select %p47, 0, %s46
      %s49 = ssub.s32 %s29, %s48
      %s50 = ssub.s32 %s30, %s44
      %s51 = sor.u32 %s49, %s50
      %p52 = scmp.eq.s32.totalorder %s51, 0
      %s54 = sadd.s32 %s53, 1
      %s55 = scalar_select %p52, %s53, %s54
      %p58 = pneg %p52
      %p59 = scmp.eq.s32.totalorder %s22, 1
      %p60 = por %p58, %p59
      %p61 = scmp.ne.s32.totalorder %s53, %s56
      %p62 = scmp.eq.s32.totalorder %s22, 0
      %p63 = por %p61, %p62
      %p64 = scmp.ne.s32.totalorder %s53, %s56
      %p65 = scmp.eq.s32.totalorder %s27, 1
      %p66 = por %p64, %p65
      %p67 = scmp.ne.s32.totalorder %s56, %s57
      %p68 = scmp.eq.s32.totalorder %s27, 0
      %p69 = por %p67, %p68
      %p70 = scmp.ne.s32.totalorder %s56, %s57
      %p71 = scmp.eq.s32.totalorder %s28, 1
      %p72 = por %p70, %p71
      %p74 = scmp.ne.s32.totalorder %s57, %s73
      %p75 = scmp.eq.s32.totalorder %s28, 0
      %p76 = por %p74, %p75
      %s77 = ssub.s32 %s29, %s48
      %s78 = ssub.s32 %s31, %s40
      %s79 = sor.u32 %s77, %s78
      %p80 = scmp.eq.s32.totalorder %s79, 0
      %s82 = sadd.s32 %s81, 1
      %s83 = scalar_select %p80, %s81, %s82
      %p86 = pneg %p80
      %p87 = scmp.eq.s32.totalorder %s22, 1
      %p88 = por %p86, %p87
      %p89 = scmp.ne.s32.totalorder %s81, %s84
      %p90 = scmp.eq.s32.totalorder %s22, 0
      %p91 = por %p89, %p90
      %p92 = scmp.ne.s32.totalorder %s81, %s84
      %p93 = scmp.eq.s32.totalorder %s27, 1
      %p94 = por %p92, %p93
      %p95 = scmp.ne.s32.totalorder %s84, %s85
      %p96 = scmp.eq.s32.totalorder %s27, 0
      %p97 = por %p95, %p96
      %p98 = scmp.ne.s32.totalorder %s84, %s85
      %p99 = scmp.eq.s32.totalorder %s28, 1
      %p100 = por %p98, %p99
      %p102 = scmp.ne.s32.totalorder %s85, %s101
      %p103 = scmp.eq.s32.totalorder %s28, 0
      %p104 = por %p102, %p103
      %s105 = ssub.s32 %s29, %s48
      %s106 = ssub.s32 %s31, %s40
      %s107 = sor.u32 %s105, %s106
      %p108 = scmp.eq.s32.totalorder %s107, 0
      %s110 = sadd.s32 %s109, 1
      %s111 = scalar_select %p108, %s109, %s110
      %p114 = pneg %p108
      %p115 = scmp.eq.s32.totalorder %s22, 1
      %p116 = por %p114, %p115
      %p117 = scmp.ne.s32.totalorder %s109, %s112
      %p118 = scmp.eq.s32.totalorder %s22, 0
      %p119 = por %p117, %p118
      %p120 = scmp.ne.s32.totalorder %s109, %s112
      %p121 = scmp.eq.s32.totalorder %s27, 1
      %p122 = por %p120, %p121
      %p123 = scmp.ne.s32.totalorder %s112, %s113
      %p124 = scmp.eq.s32.totalorder %s27, 0
      %p125 = por %p123, %p124
      %p126 = scmp.ne.s32.totalorder %s112, %s113
      %p127 = scmp.eq.s32.totalorder %s28, 1
      %p128 = por %p126, %p127
      %p130 = scmp.ne.s32.totalorder %s113, %s129
      %p131 = scmp.eq.s32.totalorder %s28, 0
      %p132 = por %p130, %p131
      %s133 = ssub.s32 %s31, %s40
      %p134 = scmp.eq.s32.totalorder %s133, 0
      %s136 = sadd.s32 %s135, 1
      %s137 = scalar_select %p134, %s135, %s136
      %p140 = pneg %p134
      %p141 = scmp.eq.s32.totalorder %s22, 1
      %p142 = por %p140, %p141
      %p143 = scmp.ne.s32.totalorder %s135, %s138
      %p144 = scmp.eq.s32.totalorder %s22, 0
      %p145 = por %p143, %p144
      %p146 = scmp.ne.s32.totalorder %s135, %s138
      %p147 = scmp.eq.s32.totalorder %s27, 1
      %p148 = por %p146, %p147
      %p149 = scmp.ne.s32.totalorder %s138, %s139
      %p150 = scmp.eq.s32.totalorder %s27, 0
      %p151 = por %p149, %p150
      %p152 = scmp.ne.s32.totalorder %s138, %s139
      %p153 = scmp.eq.s32.totalorder %s28, 1
      %p154 = por %p152, %p153
      %p156 = scmp.ne.s32.totalorder %s139, %s155
      %p157 = scmp.eq.s32.totalorder %s28, 0
      %p158 = por %p156, %p157
      %s160 = sadd.s32 %s159, 1
      %p163 = scmp.eq.s32.totalorder %s22, 1
      %p164 = scmp.ne.s32.totalorder %s159, %s161
      %p165 = scmp.eq.s32.totalorder %s22, 0
      %p166 = por %p164, %p165
      %p167 = scmp.ne.s32.totalorder %s159, %s161
      %p168 = scmp.eq.s32.totalorder %s27, 1
      %p169 = por %p167, %p168
      %p170 = scmp.ne.s32.totalorder %s161, %s162
      %p171 = scmp.eq.s32.totalorder %s27, 0
      %p172 = por %p170, %p171
      %p173 = scmp.ne.s32.totalorder %s161, %s162
      %p174 = scmp.eq.s32.totalorder %s28, 1
      %p175 = por %p173, %p174
      %p177 = scmp.ne.s32.totalorder %s162, %s176
      %p178 = scmp.eq.s32.totalorder %s28, 0
      %p179 = por %p177, %p178
      %s181 = sadd.s32 %s180, 1
      %p184 = scmp.eq.s32.totalorder %s22, 1
      %p185 = scmp.ne.s32.totalorder %s180, %s182
      %p186 = scmp.eq.s32.totalorder %s22, 0
      %p187 = por %p185, %p186
      %p188 = scmp.ne.s32.totalorder %s180, %s182
      %p189 = scmp.eq.s32.totalorder %s27, 1
      %p190 = por %p188, %p189
      %p191 = scmp.ne.s32.totalorder %s182, %s183
      %p192 = scmp.eq.s32.totalorder %s27, 0
      %p193 = por %p191, %p192
      %p194 = scmp.ne.s32.totalorder %s182, %s183
      %p195 = scmp.eq.s32.totalorder %s28, 1
      %p196 = por %p194, %p195
      %p198 = scmp.ne.s32.totalorder %s183, %s197
      %p199 = scmp.eq.s32.totalorder %s28, 0
      %p200 = por %p198, %p199
      %s201 = ssub.s32 %s29, %s48
      %s202 = ssub.s32 %s30, %s44
      %s203 = sor.u32 %s201, %s202
      %p204 = scmp.eq.s32.totalorder %s203, 0
      %s206 = sadd.s32 %s205, 1
      %s207 = scalar_select %p204, %s205, %s206
      %p210 = pneg %p204
      %p211 = scmp.eq.s32.totalorder %s22, 1
      %p212 = por %p210, %p211
      %p213 = scmp.ne.s32.totalorder %s205, %s208
      %p214 = scmp.eq.s32.totalorder %s22, 0
      %p215 = por %p213, %p214
      %p216 = scmp.ne.s32.totalorder %s205, %s208
      %p217 = scmp.eq.s32.totalorder %s27, 1
      %p218 = por %p216, %p217
      %p219 = scmp.ne.s32.totalorder %s208, %s209
      %p220 = scmp.eq.s32.totalorder %s27, 0
      %p221 = por %p219, %p220
      %p222 = scmp.ne.s32.totalorder %s208, %s209
      %p223 = scmp.eq.s32.totalorder %s28, 1
      %p224 = por %p222, %p223
      %p226 = scmp.ne.s32.totalorder %s209, %s225
      %p227 = scmp.eq.s32.totalorder %s28, 0
      %p228 = por %p226, %p227
      %p229 = scmp.le.s32.totalorder 1, %s22
      %p230 = scmp.lt.s32.totalorder %s22, 3
      %p231 = pnand %p229, %p230
      %p232 = pneg %p231
      // Predicated region
      $region9: #{tpu_custom_call.1} parent=5 // pred_check
        _
      $region10: #{tpu_custom_call.1} parent=5 // pred_check_branch
        %234 = sbr.rel (%p231) target = $region12
      $region11: #{tpu_custom_call.1} parent=5 // pred_region
        %s235 = ssub.s32 %s22, 1
        // Predicated region
        $region13: #{tpu_custom_call.1} parent=11 // pred_check
          %p236 = pneg %p151
        $region14: #{tpu_custom_call.1} parent=11 // pred_check_branch
          %238 = sbr.rel (%p236) target = $region16
        $region15: #{tpu_custom_call.1} parent=11 // pred_region
          %p239 = scmp.lt.s32.totalorder %s34, 0
          %s240 = scalar_select %p239, %s34, 0
          %s241 = scalar_lea.vmem %s3, %s240
        $region16: #{tpu_custom_call.1} parent=11 // pred_fallthru
          _
        // Predicated region
        $region17: #{tpu_custom_call.1} parent=11 // pred_check
          %p242 = pneg %p172
        $region18: #{tpu_custom_call.1} parent=11 // pred_check_branch
          %244 = sbr.rel (%p242) target = $region20
        $region19: #{tpu_custom_call.1} parent=11 // pred_region
          %s246 = ssub.s32 2048, 2048
          %247 = vsyncadd [#allocation12], %s246
          %s248 = sshll.u32 [#allocation11], 4
          %s249 = int_to_ptr.vmem [resolvable:$true] %s248
          %254 = dma.hbm_to_vmem [thread:$0]  %s4, 2048, %s249, [#allocation12], 128, 128, 8
        $region20: #{tpu_custom_call.1} parent=11 // pred_fallthru
          _
        // Predicated region
        $region21: #{tpu_custom_call.1} parent=11 // pred_check
          %p255 = pneg %p193
        $region22: #{tpu_custom_call.1} parent=11 // pred_check_branch
          %257 = sbr.rel (%p255) target = $region24
        $region23: #{tpu_custom_call.1} parent=11 // pred_region
          _
        $region24: #{tpu_custom_call.1} parent=11 // pred_fallthru
          _
      $region12: #{tpu_custom_call.1} parent=5 // pred_fallthru
        _
      %p258 = scmp.lt.s32.totalorder %s22, 2
      // Predicated region
      $region25: #{tpu_custom_call.1} parent=5 // pred_check
        %p259 = pneg %p258
      $region26: #{tpu_custom_call.1} parent=5 // pred_check_branch
        %261 = sbr.rel (%p259) target = $region28
      $region27: #{tpu_custom_call.1} parent=5 // pred_region
        // Predicated region
        $region29: #{tpu_custom_call.1} parent=27 // pred_check
          %p262 = pneg %p63
        $region30: #{tpu_custom_call.1} parent=27 // pred_check_branch
          %264 = sbr.rel (%p262) target = $region32
        $region31: #{tpu_custom_call.1} parent=27 // pred_region
          %s265 = sand.u32 %s53, 1
          %s266 = scalar_lea.sflag [#allocation6], %s265
          %s267 = sand.u32 %s53, 1
          %s268 = smul.addr %s267, 128
          %s269 = scalar_lea.vmem [#allocation5], %s268
          %s270 = smul.u32 16, %s30
          %s272 = ssub.s32 2048, 2048
          %273 = vsyncadd %s266, %s272
          %s274 = smul.addr %s29, 16
          %s275 = sadd.s32 %s270, %s274
          %s276 = smul.addr %s275, 128
          %s277 = scalar_lea.hbm %s0, %s276
          %s278 = sshll.u32 %s269, 4
          %s279 = int_to_ptr.vmem [resolvable:$true] %s278
          %284 = dma.hbm_to_vmem [thread:$0]  %s277, 2048, %s279, %s266, 128, 128, 8
        $region32: #{tpu_custom_call.1} parent=27 // pred_fallthru
          _
        // Predicated region
        $region33: #{tpu_custom_call.1} parent=27 // pred_check
          %p285 = pneg %p91
        $region34: #{tpu_custom_call.1} parent=27 // pred_check_branch
          %287 = sbr.rel (%p285) target = $region36
        $region35: #{tpu_custom_call.1} parent=27 // pred_region
          %s288 = sand.u32 %s22, 1
          %s289 = scalar_lea.sflag [#allocation9], %s288
          %s290 = sand.u32 %s81, 1
          %s291 = smul.addr %s290, 128
          %s292 = scalar_lea.vmem [#allocation8], %s291
          %s293 = smul.u32 16, %s31
          %s295 = ssub.s32 2048, 2048
          %296 = vsyncadd %s289, %s295
          %s297 = smul.addr %s29, 16
          %s298 = sadd.s32 %s293, %s297
          %s299 = smul.addr %s298, 128
          %s300 = scalar_lea.hbm %s1, %s299
          %s301 = sshll.u32 %s292, 4
          %s302 = int_to_ptr.vmem [resolvable:$true] %s301
          %307 = dma.hbm_to_vmem [thread:$0]  %s300, 2048, %s302, %s289, 128, 128, 8
        $region36: #{tpu_custom_call.1} parent=27 // pred_fallthru
          _
        // Predicated region
        $region37: #{tpu_custom_call.1} parent=27 // pred_check
          %p308 = pneg %p119
        $region38: #{tpu_custom_call.1} parent=27 // pred_check_branch
          %310 = sbr.rel (%p308) target = $region40
        $region39: #{tpu_custom_call.1} parent=27 // pred_region
          %s311 = sand.u32 %s22, 1
          %s312 = scalar_lea.sflag [#allocation9], %s311
          %s313 = sand.u32 %s109, 1
          %s314 = smul.addr %s313, 128
          %s315 = scalar_lea.vmem [#allocation10], %s314
          %s316 = smul.u32 16, %s31
          %s318 = ssub.s32 2048, 2048
          %319 = vsyncadd %s312, %s318
          %s320 = smul.addr %s29, 16
          %s321 = sadd.s32 %s316, %s320
          %s322 = smul.addr %s321, 128
          %s323 = scalar_lea.hbm %s2, %s322
          %s324 = sshll.u32 %s315, 4
          %s325 = int_to_ptr.vmem [resolvable:$true] %s324
          %330 = dma.hbm_to_vmem [thread:$0]  %s323, 2048, %s325, %s312, 128, 128, 8
        $region40: #{tpu_custom_call.1} parent=27 // pred_fallthru
          _
      $region28: #{tpu_custom_call.1} parent=5 // pred_fallthru
        _
      %p331 = scmp.le.s32.totalorder 1, %s22
      %p332 = scmp.lt.s32.totalorder %s22, 3
      %p333 = pnand %p331, %p332
      %p334 = pneg %p333
      // Predicated region
      $region41: #{tpu_custom_call.1} parent=5 // pred_check
        _
      $region42: #{tpu_custom_call.1} parent=5 // pred_check_branch
        %336 = sbr.rel (%p333) target = $region44
      $region43: #{tpu_custom_call.1} parent=5 // pred_region
        %s337 = ssub.s32 %s22, 1
        %s338 = sand.u32 %s56, 1
        %s339 = scalar_lea.sflag [#allocation6], %s338
        %s340 = sand.u32 %s56, 1
        %s341 = smul.addr %s340, 128
        %s342 = scalar_lea.vmem [#allocation5], %s341
        // Predicated region
        $region45: #{tpu_custom_call.1} parent=43 // pred_check
          %p343 = pneg %p69
        $region46: #{tpu_custom_call.1} parent=43 // pred_check_branch
          %345 = sbr.rel (%p343) target = $region48
        $region47: #{tpu_custom_call.1} parent=43 // pred_region
          %346 = dma.done %s339, 2048
        $region48: #{tpu_custom_call.1} parent=43 // pred_fallthru
          _
        %s347 = sand.u32 %s27, 1
        %s348 = scalar_lea.sflag [#allocation9], %s347
        %s349 = sand.u32 %s84, 1
        %s350 = smul.addr %s349, 128
        %s351 = scalar_lea.vmem [#allocation8], %s350
        // Predicated region
        $region49: #{tpu_custom_call.1} parent=43 // pred_check
          %p352 = pneg %p97
        $region50: #{tpu_custom_call.1} parent=43 // pred_check_branch
          %354 = sbr.rel (%p352) target = $region52
        $region51: #{tpu_custom_call.1} parent=43 // pred_region
          %355 = dma.done %s348, 2048
        $region52: #{tpu_custom_call.1} parent=43 // pred_fallthru
          _
        %s356 = sand.u32 %s27, 1
        %s357 = scalar_lea.sflag [#allocation9], %s356
        %s358 = sand.u32 %s112, 1
        %s359 = smul.addr %s358, 128
        %s360 = scalar_lea.vmem [#allocation10], %s359
        // Predicated region
        $region53: #{tpu_custom_call.1} parent=43 // pred_check
          %p361 = pneg %p125
        $region54: #{tpu_custom_call.1} parent=43 // pred_check_branch
          %363 = sbr.rel (%p361) target = $region56
        $region55: #{tpu_custom_call.1} parent=43 // pred_region
          %364 = dma.done %s357, 2048
        $region56: #{tpu_custom_call.1} parent=43 // pred_fallthru
          _
        // Predicated region
        $region57: #{tpu_custom_call.1} parent=43 // pred_check
          %p365 = pneg %p172
        $region58: #{tpu_custom_call.1} parent=43 // pred_check_branch
          %367 = sbr.rel (%p365) target = $region60
        $region59: #{tpu_custom_call.1} parent=43 // pred_region
          %368 = dma.done [#allocation12], 2048
        $region60: #{tpu_custom_call.1} parent=43 // pred_fallthru
          _
        %s369 = sand.u32 %s56, 1
        %s370 = scalar_lea.sflag [#allocation6], %s369
        %s371 = sand.u32 %s56, 1
        %s372 = smul.addr %s371, 128
        %s373 = scalar_lea.vmem [#allocation5], %s372
        %p374 = pneg %p69
        %p375 = pneg %p66
        %s376 = sand.u32 %s27, 1
        %s377 = scalar_lea.sflag [#allocation9], %s376
        %s378 = sand.u32 %s84, 1
        %s379 = smul.addr %s378, 128
        %s380 = scalar_lea.vmem [#allocation8], %s379
        %p381 = pneg %p97
        %p382 = pneg %p94
        %s383 = sand.u32 %s27, 1
        %s384 = scalar_lea.sflag [#allocation9], %s383
        %s385 = sand.u32 %s112, 1
        %s386 = smul.addr %s385, 128
        %s387 = scalar_lea.vmem [#allocation10], %s386
        %p388 = pneg %p125
        %p389 = pneg %p122
        %p390 = scmp.lt.s32.totalorder %s34, 0
        %s391 = scalar_select %p390, %s34, 0
        %s392 = scalar_lea.vmem %s3, %s391
        %p393 = pneg %p151
        %p394 = pneg %p148
        %p395 = pneg %p172
        %p396 = pneg %p169
        %p397 = pneg %p193
        %p398 = pneg %p190
        %p399 = pneg %p221
        %p400 = pneg %p218
        %s401 = sand.u32 %s208, 1
        %s402 = scalar_lea.sflag [#allocation7], %s401
        %s403 = sand.u32 %s208, 1
        %s404 = smul.addr %s403, 128
        %s405 = scalar_lea.vmem [#allocation13], %s404
        %s406 = smul.u32 16, %s33
        %s407 = smul.u32 16, %s34
        %s408 = smul.u32 16, %s34
        %p409 = scmp.lt.s32.totalorder %s34, 0
        %s410 = scalar_select %p409, %s34, 0
        %s411 = scalar_lea.vmem %s3, %s410
        %s412 = smul.u32 16, %s33
        %p413 = scmp.eq.s32.totalorder %s34, 0
        // Predicated region
        $region61: #{tpu_custom_call.1} parent=43 // pred_check
          %p414 = pneg %p413
        $region62: #{tpu_custom_call.1} parent=43 // pred_check_branch
          %416 = sbr.rel (%p414) target = $region64
        $region63: #{tpu_custom_call.1} parent=43 // pred_region
          %vm417 = vcmask 7168
          %418 = vst.msk [vmem:[#allocation2] sm:$0xff] %vm417, -inf
          %419 = vst.msk [vmem:[#allocation2 + $0x8] sm:$0xff] %vm417, -inf
          %420 = vst.msk [vmem:[#allocation2 + $0x10] sm:$0xff] %vm417, -inf
          %421 = vst.msk [vmem:[#allocation2 + $0x18] sm:$0xff] %vm417, -inf
          %422 = vst.msk [vmem:[#allocation2 + $0x20] sm:$0xff] %vm417, -inf
          %423 = vst.msk [vmem:[#allocation2 + $0x28] sm:$0xff] %vm417, -inf
          %424 = vst.msk [vmem:[#allocation2 + $0x30] sm:$0xff] %vm417, -inf
          %425 = vst.msk [vmem:[#allocation2 + $0x38] sm:$0xff] %vm417, -inf
          %426 = vst.msk [vmem:[#allocation2 + $0x40] sm:$0xff] %vm417, -inf
          %427 = vst.msk [vmem:[#allocation2 + $0x48] sm:$0xff] %vm417, -inf
          %428 = vst.msk [vmem:[#allocation2 + $0x50] sm:$0xff] %vm417, -inf
          %429 = vst.msk [vmem:[#allocation2 + $0x58] sm:$0xff] %vm417, -inf
          %430 = vst.msk [vmem:[#allocation2 + $0x60] sm:$0xff] %vm417, -inf
          %431 = vst.msk [vmem:[#allocation2 + $0x68] sm:$0xff] %vm417, -inf
          %432 = vst.msk [vmem:[#allocation2 + $0x70] sm:$0xff] %vm417, -inf
          %433 = vst.msk [vmem:[#allocation2 + $0x78] sm:$0xff] %vm417, -inf
          %434 = vst.msk [vmem:[#allocation3] sm:$0xff] %vm417, 0.0
          %435 = vst.msk [vmem:[#allocation3 + $0x8] sm:$0xff] %vm417, 0.0
          %436 = vst.msk [vmem:[#allocation3 + $0x10] sm:$0xff] %vm417, 0.0
          %437 = vst.msk [vmem:[#allocation3 + $0x18] sm:$0xff] %vm417, 0.0
          %438 = vst.msk [vmem:[#allocation3 + $0x20] sm:$0xff] %vm417, 0.0
          %439 = vst.msk [vmem:[#allocation3 + $0x28] sm:$0xff] %vm417, 0.0
          %440 = vst.msk [vmem:[#allocation3 + $0x30] sm:$0xff] %vm417, 0.0
          %441 = vst.msk [vmem:[#allocation3 + $0x38] sm:$0xff] %vm417, 0.0
          %442 = vst.msk [vmem:[#allocation3 + $0x40] sm:$0xff] %vm417, 0.0
          %443 = vst.msk [vmem:[#allocation3 + $0x48] sm:$0xff] %vm417, 0.0
          %444 = vst.msk [vmem:[#allocation3 + $0x50] sm:$0xff] %vm417, 0.0
          %445 = vst.msk [vmem:[#allocation3 + $0x58] sm:$0xff] %vm417, 0.0
          %446 = vst.msk [vmem:[#allocation3 + $0x60] sm:$0xff] %vm417, 0.0
          %447 = vst.msk [vmem:[#allocation3 + $0x68] sm:$0xff] %vm417, 0.0
          %448 = vst.msk [vmem:[#allocation3 + $0x70] sm:$0xff] %vm417, 0.0
          %449 = vst.msk [vmem:[#allocation3 + $0x78] sm:$0xff] %vm417, 0.0
          %450 = vst [vmem:[#allocation4] sm:$0xff] 0.0
          %451 = vst [vmem:[#allocation4 + $0x8] sm:$0xff] 0.0
          %452 = vst [vmem:[#allocation4 + $0x10] sm:$0xff] 0.0
          %453 = vst [vmem:[#allocation4 + $0x18] sm:$0xff] 0.0
          %454 = vst [vmem:[#allocation4 + $0x20] sm:$0xff] 0.0
          %455 = vst [vmem:[#allocation4 + $0x28] sm:$0xff] 0.0
          %456 = vst [vmem:[#allocation4 + $0x30] sm:$0xff] 0.0
          %457 = vst [vmem:[#allocation4 + $0x38] sm:$0xff] 0.0
          %458 = vst [vmem:[#allocation4 + $0x40] sm:$0xff] 0.0
          %459 = vst [vmem:[#allocation4 + $0x48] sm:$0xff] 0.0
          %460 = vst [vmem:[#allocation4 + $0x50] sm:$0xff] 0.0
          %461 = vst [vmem:[#allocation4 + $0x58] sm:$0xff] 0.0
          %462 = vst [vmem:[#allocation4 + $0x60] sm:$0xff] 0.0
          %463 = vst [vmem:[#allocation4 + $0x68] sm:$0xff] 0.0
          %464 = vst [vmem:[#allocation4 + $0x70] sm:$0xff] 0.0
          %465 = vst [vmem:[#allocation4 + $0x78] sm:$0xff] 0.0
        $region64: #{tpu_custom_call.1} parent=43 // pred_fallthru
          _
        %v466 = vld [vmem:[%s342] sm:$0xff]
        %v467 = vld [vmem:[%s342 + $0x8] sm:$0xff]
        %v468 = vld [vmem:[%s342 + $0x10] sm:$0xff]
        %v469 = vld [vmem:[%s342 + $0x18] sm:$0xff]
        %v470 = vld [vmem:[%s342 + $0x20] sm:$0xff]
        %v471 = vld [vmem:[%s342 + $0x28] sm:$0xff]
        %v472 = vld [vmem:[%s342 + $0x30] sm:$0xff]
        %v473 = vld [vmem:[%s342 + $0x38] sm:$0xff]
        %v474 = vld [vmem:[%s342 + $0x40] sm:$0xff]
        %v475 = vld [vmem:[%s342 + $0x48] sm:$0xff]
        %v476 = vld [vmem:[%s342 + $0x50] sm:$0xff]
        %v477 = vld [vmem:[%s342 + $0x58] sm:$0xff]
        %v478 = vld [vmem:[%s342 + $0x60] sm:$0xff]
        %v479 = vld [vmem:[%s342 + $0x68] sm:$0xff]
        %v480 = vld [vmem:[%s342 + $0x70] sm:$0xff]
        %v481 = vld [vmem:[%s342 + $0x78] sm:$0xff]
        %v482 = vld [vmem:[%s351] sm:$0xff]
        %v483 = vld [vmem:[%s351 + $0x8] sm:$0xff]
        %v484 = vld [vmem:[%s351 + $0x10] sm:$0xff]
        %v485 = vld [vmem:[%s351 + $0x18] sm:$0xff]
        %v486 = vld [vmem:[%s351 + $0x20] sm:$0xff]
        %v487 = vld [vmem:[%s351 + $0x28] sm:$0xff]
        %v488 = vld [vmem:[%s351 + $0x30] sm:$0xff]
        %v489 = vld [vmem:[%s351 + $0x38] sm:$0xff]
        %v490 = vld [vmem:[%s351 + $0x40] sm:$0xff]
        %v491 = vld [vmem:[%s351 + $0x48] sm:$0xff]
        %v492 = vld [vmem:[%s351 + $0x50] sm:$0xff]
        %v493 = vld [vmem:[%s351 + $0x58] sm:$0xff]
        %v494 = vld [vmem:[%s351 + $0x60] sm:$0xff]
        %v495 = vld [vmem:[%s351 + $0x68] sm:$0xff]
        %v496 = vld [vmem:[%s351 + $0x70] sm:$0xff]
        %v497 = vld [vmem:[%s351 + $0x78] sm:$0xff]
        %v498 = vld [vmem:[%s360] sm:$0xff]
        %v499 = vld [vmem:[%s360 + $0x8] sm:$0xff]
        %v500 = vld [vmem:[%s360 + $0x10] sm:$0xff]
        %v501 = vld [vmem:[%s360 + $0x18] sm:$0xff]
        %v502 = vld [vmem:[%s360 + $0x20] sm:$0xff]
        %v503 = vld [vmem:[%s360 + $0x28] sm:$0xff]
        %v504 = vld [vmem:[%s360 + $0x30] sm:$0xff]
        %v505 = vld [vmem:[%s360 + $0x38] sm:$0xff]
        %v506 = vld [vmem:[%s360 + $0x40] sm:$0xff]
        %v507 = vld [vmem:[%s360 + $0x48] sm:$0xff]
        %v508 = vld [vmem:[%s360 + $0x50] sm:$0xff]
        %v509 = vld [vmem:[%s360 + $0x58] sm:$0xff]
        %v510 = vld [vmem:[%s360 + $0x60] sm:$0xff]
        %v511 = vld [vmem:[%s360 + $0x68] sm:$0xff]
        %v512 = vld [vmem:[%s360 + $0x70] sm:$0xff]
        %v513 = vld [vmem:[%s360 + $0x78] sm:$0xff]
        %v514 = vld [vmem:[%s411] sm:$0x1]
        %v516 = vlaneseq
        %v517 = vshrl.u32 %v516, 7
        %v518 = vsub.s32 0, %v517
        %v519 = vrot.slane %v514, %v518
        %521 = vmatprep.subr.mxu0 0.0
        %522 = vmatpush1.xpose.msra.mxu0 %v482
        %523 = vmatprep.subr.mxu0 0.0
        %524 = vmatpush1.xpose.msra.mxu0 %v483
        %525 = vmatprep.subr.mxu0 0.0
        %526 = vmatpush1.xpose.msra.mxu0 %v484
        %527 = vmatprep.subr.mxu0 0.0
        %528 = vmatpush1.xpose.msra.mxu0 %v485
        %529 = vmatprep.subr.mxu0 0.0
        %530 = vmatpush1.xpose.msra.mxu0 %v486
        %531 = vmatprep.subr.mxu0 0.0
        %532 = vmatpush1.xpose.msra.mxu0 %v487
        %533 = vmatprep.subr.mxu0 0.0
        %534 = vmatpush1.xpose.msra.mxu0 %v488
        %535 = vmatprep.subr.mxu0 0.0
        %536 = vmatpush1.xpose.msra.mxu0 %v489
        %537 = vmatprep.subr.mxu0 0.0
        %538 = vmatpush1.xpose.msra.mxu0 %v490
        %539 = vmatprep.subr.mxu0 0.0
        %540 = vmatpush1.xpose.msra.mxu0 %v491
        %541 = vmatprep.subr.mxu0 0.0
        %542 = vmatpush1.xpose.msra.mxu0 %v492
        %543 = vmatprep.subr.mxu0 0.0
        %544 = vmatpush1.xpose.msra.mxu0 %v493
        %545 = vmatprep.subr.mxu0 0.0
        %546 = vmatpush1.xpose.msra.mxu0 %v494
        %547 = vmatprep.subr.mxu0 0.0
        %548 = vmatpush1.xpose.msra.mxu0 %v495
        %549 = vmatprep.subr.mxu0 0.0
        %550 = vmatpush1.xpose.msra.mxu0 %v496
        %551 = vmatprep.subr.mxu0 0.0
        %552 = vmatpush1.xpose.msra.mxu0 %v497
        %553 = vmatprep.subr.mxu0 0.0
        %554 = vmatpush1.xpose.msra.mxu0 0.0
        %555 = vmatprep.subr.mxu0 0.0
        %556 = vmatpush1.xpose.msra.mxu0 0.0
        %557 = vmatprep.subr.mxu0 0.0
        %558 = vmatpush1.xpose.msra.mxu0 0.0
        %559 = vmatprep.subr.mxu0 0.0
        %560 = vmatpush1.xpose.msra.mxu0 0.0
        %561 = vmatprep.subr.mxu0 0.0
        %562 = vmatpush1.xpose.msra.mxu0 0.0
        %563 = vmatprep.subr.mxu0 0.0
        %564 = vmatpush1.xpose.msra.mxu0 0.0
        %565 = vmatprep.subr.mxu0 0.0
        %566 = vmatpush1.xpose.msra.mxu0 0.0
        %567 = vmatprep.subr.mxu0 0.0
        %568 = vmatpush1.xpose.msra.mxu0 0.0
        %569 = vmatprep.subr.mxu0 0.0
        %570 = vmatpush1.xpose.msra.mxu0 0.0
        %571 = vmatprep.subr.mxu0 0.0
        %572 = vmatpush1.xpose.msra.mxu0 0.0
        %573 = vmatprep.subr.mxu0 0.0
        %574 = vmatpush1.xpose.msra.mxu0 0.0
        %575 = vmatprep.subr.mxu0 0.0
        %576 = vmatpush1.xpose.msra.mxu0 0.0
        %577 = vmatprep.subr.mxu0 0.0
        %578 = vmatpush1.xpose.msra.mxu0 0.0
        %579 = vmatprep.subr.mxu0 0.0
        %580 = vmatpush1.xpose.msra.mxu0 0.0
        %581 = vmatprep.subr.mxu0 0.0
        %582 = vmatpush1.xpose.msra.mxu0 0.0
        %583 = vmatprep.subr.mxu0 0.0
        %584 = vmatpush1.xpose.msra.mxu0 0.0
        %585 = vmatprep.mubr.f32.mxu0 0.0
        %586 = vmatmul.mubr.f32.gmra.mrb[0].mxu0 %v466
        %v587 = vpop.f32.mrb[0].mxu0
        %v588 = vadd.f32 %v519, %v587
        %v589 = vpop.f32.mrb[0].mxu0
        %590 = vmatprep.mubr.f32.mxu0 0.0
        %591 = vmatmul.mubr.f32.gmra.mrb[0].mxu0 %v467
        %v592 = vpop.f32.mrb[0].mxu0
        %v593 = vadd.f32 %v519, %v592
        %v594 = vpop.f32.mrb[0].mxu0
        %595 = vmatprep.mubr.f32.mxu0 0.0
        %596 = vmatmul.mubr.f32.gmra.mrb[0].mxu0 %v468
        %v597 = vpop.f32.mrb[0].mxu0
        %v598 = vadd.f32 %v519, %v597
        %v599 = vpop.f32.mrb[0].mxu0
        %600 = vmatprep.mubr.f32.mxu0 0.0
        %601 = vmatmul.mubr.f32.gmra.mrb[0].mxu0 %v469
        %v602 = vpop.f32.mrb[0].mxu0
        %v603 = vadd.f32 %v519, %v602
        %v604 = vpop.f32.mrb[0].mxu0
        %605 = vmatprep.mubr.f32.mxu0 0.0
        %606 = vmatmul.mubr.f32.gmra.mrb[0].mxu0 %v470
        %v607 = vpop.f32.mrb[0].mxu0
        %v608 = vadd.f32 %v519, %v607
        %v609 = vpop.f32.mrb[0].mxu0
        %610 = vmatprep.mubr.f32.mxu0 0.0
        %611 = vmatmul.mubr.f32.gmra.mrb[0].mxu0 %v471
        %v612 = vpop.f32.mrb[0].mxu0
        %v613 = vadd.f32 %v519, %v612
        %v614 = vpop.f32.mrb[0].mxu0
        %615 = vmatprep.mubr.f32.mxu0 0.0
        %616 = vmatmul.mubr.f32.gmra.mrb[0].mxu0 %v472
        %v617 = vpop.f32.mrb[0].mxu0
        %v618 = vadd.f32 %v519, %v617
        %v619 = vpop.f32.mrb[0].mxu0
        %620 = vmatprep.mubr.f32.mxu0 0.0
        %621 = vmatmul.mubr.f32.gmra.mrb[0].mxu0 %v473
        %v622 = vpop.f32.mrb[0].mxu0
        %v623 = vadd.f32 %v519, %v622
        %v624 = vpop.f32.mrb[0].mxu0
        %625 = vmatprep.mubr.f32.mxu0 0.0
        %626 = vmatmul.mubr.f32.gmra.mrb[0].mxu0 %v474
        %v627 = vpop.f32.mrb[0].mxu0
        %v628 = vadd.f32 %v519, %v627
        %v629 = vpop.f32.mrb[0].mxu0
        %630 = vmatprep.mubr.f32.mxu0 0.0
        %631 = vmatmul.mubr.f32.gmra.mrb[0].mxu0 %v475
        %v632 = vpop.f32.mrb[0].mxu0
        %v633 = vadd.f32 %v519, %v632
        %v634 = vpop.f32.mrb[0].mxu0
        %635 = vmatprep.mubr.f32.mxu0 0.0
        %636 = vmatmul.mubr.f32.gmra.mrb[0].mxu0 %v476
        %v637 = vpop.f32.mrb[0].mxu0
        %v638 = vadd.f32 %v519, %v637
        %v639 = vpop.f32.mrb[0].mxu0
        %640 = vmatprep.mubr.f32.mxu0 0.0
        %641 = vmatmul.mubr.f32.gmra.mrb[0].mxu0 %v477
        %v642 = vpop.f32.mrb[0].mxu0
        %v643 = vadd.f32 %v519, %v642
        %v644 = vpop.f32.mrb[0].mxu0
        %645 = vmatprep.mubr.f32.mxu0 0.0
        %646 = vmatmul.mubr.f32.gmra.mrb[0].mxu0 %v478
        %v647 = vpop.f32.mrb[0].mxu0
        %v648 = vadd.f32 %v519, %v647
        %v649 = vpop.f32.mrb[0].mxu0
        %650 = vmatprep.mubr.f32.mxu0 0.0
        %651 = vmatmul.mubr.f32.gmra.mrb[0].mxu0 %v479
        %v652 = vpop.f32.mrb[0].mxu0
        %v653 = vadd.f32 %v519, %v652
        %v654 = vpop.f32.mrb[0].mxu0
        %655 = vmatprep.mubr.f32.mxu0 0.0
        %656 = vmatmul.mubr.f32.gmra.mrb[0].mxu0 %v480
        %v657 = vpop.f32.mrb[0].mxu0
        %v658 = vadd.f32 %v519, %v657
        %v659 = vpop.f32.mrb[0].mxu0
        %660 = vmatprep.mubr.f32.mxu0 0.0
        %661 = vmatmul.mubr.f32.gmra.mrb[0].mxu0 %v481
        %v662 = vpop.f32.mrb[0].mxu0
        %v663 = vadd.f32 %v519, %v662
        %v664 = vpop.f32.mrb[0].mxu0
        %665 = vdwg.mxu0
        %v666 = vld [vmem:[#allocation2] sm:$0xff]
        %v667 = vld [vmem:[#allocation2 + $0x8] sm:$0xff]
        %v668 = vld [vmem:[#allocation2 + $0x10] sm:$0xff]
        %v669 = vld [vmem:[#allocation2 + $0x18] sm:$0xff]
        %v670 = vld [vmem:[#allocation2 + $0x20] sm:$0xff]
        %v671 = vld [vmem:[#allocation2 + $0x28] sm:$0xff]
        %v672 = vld [vmem:[#allocation2 + $0x30] sm:$0xff]
        %v673 = vld [vmem:[#allocation2 + $0x38] sm:$0xff]
        %v674 = vld [vmem:[#allocation2 + $0x40] sm:$0xff]
        %v675 = vld [vmem:[#allocation2 + $0x48] sm:$0xff]
        %v676 = vld [vmem:[#allocation2 + $0x50] sm:$0xff]
        %v677 = vld [vmem:[#allocation2 + $0x58] sm:$0xff]
        %v678 = vld [vmem:[#allocation2 + $0x60] sm:$0xff]
        %v679 = vld [vmem:[#allocation2 + $0x68] sm:$0xff]
        %v680 = vld [vmem:[#allocation2 + $0x70] sm:$0xff]
        %v681 = vld [vmem:[#allocation2 + $0x78] sm:$0xff]
        %682 = vmax.xlane.f32.xlu0 %v588
        %v683 = vpop.xlane.xlu0 %682
        %684 = vmax.xlane.f32.xlu0 %v593
        %v685 = vpop.xlane.xlu0 %684
        %686 = vmax.xlane.f32.xlu0 %v598
        %v687 = vpop.xlane.xlu0 %686
        %688 = vmax.xlane.f32.xlu0 %v603
        %v689 = vpop.xlane.xlu0 %688
        %690 = vmax.xlane.f32.xlu0 %v608
        %v691 = vpop.xlane.xlu0 %690
        %692 = vmax.xlane.f32.xlu0 %v613
        %v693 = vpop.xlane.xlu0 %692
        %694 = vmax.xlane.f32.xlu0 %v618
        %v695 = vpop.xlane.xlu0 %694
        %696 = vmax.xlane.f32.xlu0 %v623
        %v697 = vpop.xlane.xlu0 %696
        %698 = vmax.xlane.f32.xlu0 %v628
        %v699 = vpop.xlane.xlu0 %698
        %700 = vmax.xlane.f32.xlu0 %v633
        %v701 = vpop.xlane.xlu0 %700
        %702 = vmax.xlane.f32.xlu0 %v638
        %v703 = vpop.xlane.xlu0 %702
        %704 = vmax.xlane.f32.xlu0 %v643
        %v705 = vpop.xlane.xlu0 %704
        %706 = vmax.xlane.f32.xlu0 %v648
        %v707 = vpop.xlane.xlu0 %706
        %708 = vmax.xlane.f32.xlu0 %v653
        %v709 = vpop.xlane.xlu0 %708
        %710 = vmax.xlane.f32.xlu0 %v658
        %v711 = vpop.xlane.xlu0 %710
        %712 = vmax.xlane.f32.xlu0 %v663
        %v713 = vpop.xlane.xlu0 %712
        %v714 = vmax.f32 %v666, %v683
        %v715 = vmax.f32 %v667, %v685
        %v716 = vmax.f32 %v668, %v687
        %v717 = vmax.f32 %v669, %v689
        %v718 = vmax.f32 %v670, %v691
        %v719 = vmax.f32 %v671, %v693
        %v720 = vmax.f32 %v672, %v695
        %v721 = vmax.f32 %v673, %v697
        %v722 = vmax.f32 %v674, %v699
        %v723 = vmax.f32 %v675, %v701
        %v724 = vmax.f32 %v676, %v703
        %v725 = vmax.f32 %v677, %v705
        %v726 = vmax.f32 %v678, %v707
        %v727 = vmax.f32 %v679, %v709
        %v728 = vmax.f32 %v680, %v711
        %v729 = vmax.f32 %v681, %v713
        %v730 = vsub.f32 %v666, %v714
        %v731 = vsub.f32 %v667, %v715
        %v732 = vsub.f32 %v668, %v716
        %v733 = vsub.f32 %v669, %v717
        %v734 = vsub.f32 %v670, %v718
        %v735 = vsub.f32 %v671, %v719
        %v736 = vsub.f32 %v672, %v720
        %v737 = vsub.f32 %v673, %v721
        %v738 = vsub.f32 %v674, %v722
        %v739 = vsub.f32 %v675, %v723
        %v740 = vsub.f32 %v676, %v724
        %v741 = vsub.f32 %v677, %v725
        %v742 = vsub.f32 %v678, %v726
        %v743 = vsub.f32 %v679, %v727
        %v744 = vsub.f32 %v680, %v728
        %v745 = vsub.f32 %v681, %v729
        %v746 = vmul.f32 %v730, 1.442695
        %v747 = vpow.pop %v746
        %v748 = vmul.f32 %v731, 1.442695
        %v749 = vpow.pop %v748
        %v750 = vmul.f32 %v732, 1.442695
        %v751 = vpow.pop %v750
        %v752 = vmul.f32 %v733, 1.442695
        %v753 = vpow.pop %v752
        %v754 = vmul.f32 %v734, 1.442695
        %v755 = vpow.pop %v754
        %v756 = vmul.f32 %v735, 1.442695
        %v757 = vpow.pop %v756
        %v758 = vmul.f32 %v736, 1.442695
        %v759 = vpow.pop %v758
        %v760 = vmul.f32 %v737, 1.442695
        %v761 = vpow.pop %v760
        %v762 = vmul.f32 %v738, 1.442695
        %v763 = vpow.pop %v762
        %v764 = vmul.f32 %v739, 1.442695
        %v765 = vpow.pop %v764
        %v766 = vmul.f32 %v740, 1.442695
        %v767 = vpow.pop %v766
        %v768 = vmul.f32 %v741, 1.442695
        %v769 = vpow.pop %v768
        %v770 = vmul.f32 %v742, 1.442695
        %v771 = vpow.pop %v770
        %v772 = vmul.f32 %v743, 1.442695
        %v773 = vpow.pop %v772
        %v774 = vmul.f32 %v744, 1.442695
        %v775 = vpow.pop %v774
        %v776 = vmul.f32 %v745, 1.442695
        %v777 = vpow.pop %v776
        %779 = vset.pattern.permute.xlu0 0
        %780 = vperm.xlu0 %779, %v714
        %v781 = vpop.permute.xlu0 %780
        %784 = vset.pattern.permute.xlu0 0
        %785 = vperm.xlu0 %784, %v715
        %v786 = vpop.permute.xlu0 %785
        %789 = vset.pattern.permute.xlu0 0
        %790 = vperm.xlu0 %789, %v716
        %v791 = vpop.permute.xlu0 %790
        %794 = vset.pattern.permute.xlu0 0
        %795 = vperm.xlu0 %794, %v717
        %v796 = vpop.permute.xlu0 %795
        %799 = vset.pattern.permute.xlu0 0
        %800 = vperm.xlu0 %799, %v718
        %v801 = vpop.permute.xlu0 %800
        %804 = vset.pattern.permute.xlu0 0
        %805 = vperm.xlu0 %804, %v719
        %v806 = vpop.permute.xlu0 %805
        %809 = vset.pattern.permute.xlu0 0
        %810 = vperm.xlu0 %809, %v720
        %v811 = vpop.permute.xlu0 %810
        %814 = vset.pattern.permute.xlu0 0
        %815 = vperm.xlu0 %814, %v721
        %v816 = vpop.permute.xlu0 %815
        %819 = vset.pattern.permute.xlu0 0
        %820 = vperm.xlu0 %819, %v722
        %v821 = vpop.permute.xlu0 %820
        %824 = vset.pattern.permute.xlu0 0
        %825 = vperm.xlu0 %824, %v723
        %v826 = vpop.permute.xlu0 %825
        %829 = vset.pattern.permute.xlu0 0
        %830 = vperm.xlu0 %829, %v724
        %v831 = vpop.permute.xlu0 %830
        %834 = vset.pattern.permute.xlu0 0
        %835 = vperm.xlu0 %834, %v725
        %v836 = vpop.permute.xlu0 %835
        %839 = vset.pattern.permute.xlu0 0
        %840 = vperm.xlu0 %839, %v726
        %v841 = vpop.permute.xlu0 %840
        %844 = vset.pattern.permute.xlu0 0
        %845 = vperm.xlu0 %844, %v727
        %v846 = vpop.permute.xlu0 %845
        %849 = vset.pattern.permute.xlu0 0
        %850 = vperm.xlu0 %849, %v728
        %v851 = vpop.permute.xlu0 %850
        %854 = vset.pattern.permute.xlu0 0
        %855 = vperm.xlu0 %854, %v729
        %v856 = vpop.permute.xlu0 %855
        %v858 = vsub.f32 %v588, %v781
        %v859 = vsub.f32 %v593, %v786
        %v860 = vsub.f32 %v598, %v791
        %v861 = vsub.f32 %v603, %v796
        %v862 = vsub.f32 %v608, %v801
        %v863 = vsub.f32 %v613, %v806
        %v864 = vsub.f32 %v618, %v811
        %v865 = vsub.f32 %v623, %v816
        %v866 = vsub.f32 %v628, %v821
        %v867 = vsub.f32 %v633, %v826
        %v868 = vsub.f32 %v638, %v831
        %v869 = vsub.f32 %v643, %v836
        %v870 = vsub.f32 %v648, %v841
        %v871 = vsub.f32 %v653, %v846
        %v872 = vsub.f32 %v658, %v851
        %v873 = vsub.f32 %v663, %v856
        %v874 = vmul.f32 %v858, 1.442695
        %v875 = vpow.pop %v874
        %v876 = vmul.f32 %v859, 1.442695
        %v877 = vpow.pop %v876
        %v878 = vmul.f32 %v860, 1.442695
        %v879 = vpow.pop %v878
        %v880 = vmul.f32 %v861, 1.442695
        %v881 = vpow.pop %v880
        %v882 = vmul.f32 %v862, 1.442695
        %v883 = vpow.pop %v882
        %v884 = vmul.f32 %v863, 1.442695
        %v885 = vpow.pop %v884
        %v886 = vmul.f32 %v864, 1.442695
        %v887 = vpow.pop %v886
        %v888 = vmul.f32 %v865, 1.442695
        %v889 = vpow.pop %v888
        %v890 = vmul.f32 %v866, 1.442695
        %v891 = vpow.pop %v890
        %v892 = vmul.f32 %v867, 1.442695
        %v893 = vpow.pop %v892
        %v894 = vmul.f32 %v868, 1.442695
        %v895 = vpow.pop %v894
        %v896 = vmul.f32 %v869, 1.442695
        %v897 = vpow.pop %v896
        %v898 = vmul.f32 %v870, 1.442695
        %v899 = vpow.pop %v898
        %v900 = vmul.f32 %v871, 1.442695
        %v901 = vpow.pop %v900
        %v902 = vmul.f32 %v872, 1.442695
        %v903 = vpow.pop %v902
        %v904 = vmul.f32 %v873, 1.442695
        %v905 = vpow.pop %v904
        %v906 = vld [vmem:[#allocation3] sm:$0xff]
        %v907 = vld [vmem:[#allocation3 + $0x8] sm:$0xff]
        %v908 = vld [vmem:[#allocation3 + $0x10] sm:$0xff]
        %v909 = vld [vmem:[#allocation3 + $0x18] sm:$0xff]
        %v910 = vld [vmem:[#allocation3 + $0x20] sm:$0xff]
        %v911 = vld [vmem:[#allocation3 + $0x28] sm:$0xff]
        %v912 = vld [vmem:[#allocation3 + $0x30] sm:$0xff]
        %v913 = vld [vmem:[#allocation3 + $0x38] sm:$0xff]
        %v914 = vld [vmem:[#allocation3 + $0x40] sm:$0xff]
        %v915 = vld [vmem:[#allocation3 + $0x48] sm:$0xff]
        %v916 = vld [vmem:[#allocation3 + $0x50] sm:$0xff]
        %v917 = vld [vmem:[#allocation3 + $0x58] sm:$0xff]
        %v918 = vld [vmem:[#allocation3 + $0x60] sm:$0xff]
        %v919 = vld [vmem:[#allocation3 + $0x68] sm:$0xff]
        %v920 = vld [vmem:[#allocation3 + $0x70] sm:$0xff]
        %v921 = vld [vmem:[#allocation3 + $0x78] sm:$0xff]
        %v922 = vmul.f32 %v747, %v906
        %v923 = vmul.f32 %v749, %v907
        %v924 = vmul.f32 %v751, %v908
        %v925 = vmul.f32 %v753, %v909
        %v926 = vmul.f32 %v755, %v910
        %v927 = vmul.f32 %v757, %v911
        %v928 = vmul.f32 %v759, %v912
        %v929 = vmul.f32 %v761, %v913
        %v930 = vmul.f32 %v763, %v914
        %v931 = vmul.f32 %v765, %v915
        %v932 = vmul.f32 %v767, %v916
        %v933 = vmul.f32 %v769, %v917
        %v934 = vmul.f32 %v771, %v918
        %v935 = vmul.f32 %v773, %v919
        %v936 = vmul.f32 %v775, %v920
        %v937 = vmul.f32 %v777, %v921
        %938 = vadd.xlane.f32.xlu0 %v875
        %v939 = vpop.xlane.xlu0 %938
        %940 = vadd.xlane.f32.xlu0 %v877
        %v941 = vpop.xlane.xlu0 %940
        %942 = vadd.xlane.f32.xlu0 %v879
        %v943 = vpop.xlane.xlu0 %942
        %944 = vadd.xlane.f32.xlu0 %v881
        %v945 = vpop.xlane.xlu0 %944
        %946 = vadd.xlane.f32.xlu0 %v883
        %v947 = vpop.xlane.xlu0 %946
        %948 = vadd.xlane.f32.xlu0 %v885
        %v949 = vpop.xlane.xlu0 %948
        %950 = vadd.xlane.f32.xlu0 %v887
        %v951 = vpop.xlane.xlu0 %950
        %952 = vadd.xlane.f32.xlu0 %v889
        %v953 = vpop.xlane.xlu0 %952
        %954 = vadd.xlane.f32.xlu0 %v891
        %v955 = vpop.xlane.xlu0 %954
        %956 = vadd.xlane.f32.xlu0 %v893
        %v957 = vpop.xlane.xlu0 %956
        %958 = vadd.xlane.f32.xlu0 %v895
        %v959 = vpop.xlane.xlu0 %958
        %960 = vadd.xlane.f32.xlu0 %v897
        %v961 = vpop.xlane.xlu0 %960
        %962 = vadd.xlane.f32.xlu0 %v899
        %v963 = vpop.xlane.xlu0 %962
        %964 = vadd.xlane.f32.xlu0 %v901
        %v965 = vpop.xlane.xlu0 %964
        %966 = vadd.xlane.f32.xlu0 %v903
        %v967 = vpop.xlane.xlu0 %966
        %968 = vadd.xlane.f32.xlu0 %v905
        %v969 = vpop.xlane.xlu0 %968
        %v970 = vadd.f32 %v922, %v939
        %v971 = vadd.f32 %v923, %v941
        %v972 = vadd.f32 %v924, %v943
        %v973 = vadd.f32 %v925, %v945
        %v974 = vadd.f32 %v926, %v947
        %v975 = vadd.f32 %v927, %v949
        %v976 = vadd.f32 %v928, %v951
        %v977 = vadd.f32 %v929, %v953
        %v978 = vadd.f32 %v930, %v955
        %v979 = vadd.f32 %v931, %v957
        %v980 = vadd.f32 %v932, %v959
        %v981 = vadd.f32 %v933, %v961
        %v982 = vadd.f32 %v934, %v963
        %v983 = vadd.f32 %v935, %v965
        %v984 = vadd.f32 %v936, %v967
        %v985 = vadd.f32 %v937, %v969
        %vm986 = vcmask 7168
        %987 = vst.msk [vmem:[#allocation3] sm:$0xff] %vm986, %v970
        %988 = vst.msk [vmem:[#allocation3 + $0x8] sm:$0xff] %vm986, %v971
        %989 = vst.msk [vmem:[#allocation3 + $0x10] sm:$0xff] %vm986, %v972
        %990 = vst.msk [vmem:[#allocation3 + $0x18] sm:$0xff] %vm986, %v973
        %991 = vst.msk [vmem:[#allocation3 + $0x20] sm:$0xff] %vm986, %v974
        %992 = vst.msk [vmem:[#allocation3 + $0x28] sm:$0xff] %vm986, %v975
        %993 = vst.msk [vmem:[#allocation3 + $0x30] sm:$0xff] %vm986, %v976
        %994 = vst.msk [vmem:[#allocation3 + $0x38] sm:$0xff] %vm986, %v977
        %995 = vst.msk [vmem:[#allocation3 + $0x40] sm:$0xff] %vm986, %v978
        %996 = vst.msk [vmem:[#allocation3 + $0x48] sm:$0xff] %vm986, %v979
        %997 = vst.msk [vmem:[#allocation3 + $0x50] sm:$0xff] %vm986, %v980
        %998 = vst.msk [vmem:[#allocation3 + $0x58] sm:$0xff] %vm986, %v981
        %999 = vst.msk [vmem:[#allocation3 + $0x60] sm:$0xff] %vm986, %v982
        %1000 = vst.msk [vmem:[#allocation3 + $0x68] sm:$0xff] %vm986, %v983
        %1001 = vst.msk [vmem:[#allocation3 + $0x70] sm:$0xff] %vm986, %v984
        %1002 = vst.msk [vmem:[#allocation3 + $0x78] sm:$0xff] %vm986, %v985
        %v1003 = vld [vmem:[#allocation4] sm:$0xff]
        %v1004 = vld [vmem:[#allocation4 + $0x8] sm:$0xff]
        %v1005 = vld [vmem:[#allocation4 + $0x10] sm:$0xff]
        %v1006 = vld [vmem:[#allocation4 + $0x18] sm:$0xff]
        %v1007 = vld [vmem:[#allocation4 + $0x20] sm:$0xff]
        %v1008 = vld [vmem:[#allocation4 + $0x28] sm:$0xff]
        %v1009 = vld [vmem:[#allocation4 + $0x30] sm:$0xff]
        %v1010 = vld [vmem:[#allocation4 + $0x38] sm:$0xff]
        %v1011 = vld [vmem:[#allocation4 + $0x40] sm:$0xff]
        %v1012 = vld [vmem:[#allocation4 + $0x48] sm:$0xff]
        %v1013 = vld [vmem:[#allocation4 + $0x50] sm:$0xff]
        %v1014 = vld [vmem:[#allocation4 + $0x58] sm:$0xff]
        %v1015 = vld [vmem:[#allocation4 + $0x60] sm:$0xff]
        %v1016 = vld [vmem:[#allocation4 + $0x68] sm:$0xff]
        %v1017 = vld [vmem:[#allocation4 + $0x70] sm:$0xff]
        %v1018 = vld [vmem:[#allocation4 + $0x78] sm:$0xff]
        %1020 = vset.pattern.permute.xlu0 0
        %1021 = vperm.xlu0 %1020, %v747
        %v1022 = vpop.permute.xlu0 %1021
        %1025 = vset.pattern.permute.xlu0 0
        %1026 = vperm.xlu0 %1025, %v749
        %v1027 = vpop.permute.xlu0 %1026
        %1030 = vset.pattern.permute.xlu0 0
        %1031 = vperm.xlu0 %1030, %v751
        %v1032 = vpop.permute.xlu0 %1031
        %1035 = vset.pattern.permute.xlu0 0
        %1036 = vperm.xlu0 %1035, %v753
        %v1037 = vpop.permute.xlu0 %1036
        %1040 = vset.pattern.permute.xlu0 0
        %1041 = vperm.xlu0 %1040, %v755
        %v1042 = vpop.permute.xlu0 %1041
        %1045 = vset.pattern.permute.xlu0 0
        %1046 = vperm.xlu0 %1045, %v757
        %v1047 = vpop.permute.xlu0 %1046
        %1050 = vset.pattern.permute.xlu0 0
        %1051 = vperm.xlu0 %1050, %v759
        %v1052 = vpop.permute.xlu0 %1051
        %1055 = vset.pattern.permute.xlu0 0
        %1056 = vperm.xlu0 %1055, %v761
        %v1057 = vpop.permute.xlu0 %1056
        %1060 = vset.pattern.permute.xlu0 0
        %1061 = vperm.xlu0 %1060, %v763
        %v1062 = vpop.permute.xlu0 %1061
        %1065 = vset.pattern.permute.xlu0 0
        %1066 = vperm.xlu0 %1065, %v765
        %v1067 = vpop.permute.xlu0 %1066
        %1070 = vset.pattern.permute.xlu0 0
        %1071 = vperm.xlu0 %1070, %v767
        %v1072 = vpop.permute.xlu0 %1071
        %1075 = vset.pattern.permute.xlu0 0
        %1076 = vperm.xlu0 %1075, %v769
        %v1077 = vpop.permute.xlu0 %1076
        %1080 = vset.pattern.permute.xlu0 0
        %1081 = vperm.xlu0 %1080, %v771
        %v1082 = vpop.permute.xlu0 %1081
        %1085 = vset.pattern.permute.xlu0 0
        %1086 = vperm.xlu0 %1085, %v773
        %v1087 = vpop.permute.xlu0 %1086
        %1090 = vset.pattern.permute.xlu0 0
        %1091 = vperm.xlu0 %1090, %v775
        %v1092 = vpop.permute.xlu0 %1091
        %1095 = vset.pattern.permute.xlu0 0
        %1096 = vperm.xlu0 %1095, %v777
        %v1097 = vpop.permute.xlu0 %1096
        %v1099 = vmul.f32 %v1022, %v1003
        %v1100 = vmul.f32 %v1027, %v1004
        %v1101 = vmul.f32 %v1032, %v1005
        %v1102 = vmul.f32 %v1037, %v1006
        %v1103 = vmul.f32 %v1042, %v1007
        %v1104 = vmul.f32 %v1047, %v1008
        %v1105 = vmul.f32 %v1052, %v1009
        %v1106 = vmul.f32 %v1057, %v1010
        %v1107 = vmul.f32 %v1062, %v1011
        %v1108 = vmul.f32 %v1067, %v1012
        %v1109 = vmul.f32 %v1072, %v1013
        %v1110 = vmul.f32 %v1077, %v1014
        %v1111 = vmul.f32 %v1082, %v1015
        %v1112 = vmul.f32 %v1087, %v1016
        %v1113 = vmul.f32 %v1092, %v1017
        %v1114 = vmul.f32 %v1097, %v1018
        %1115 = vmatprep.subr.mxu0 0.0
        %1116 = vmatpush1.msra.mxu0 %v498
        %1117 = vmatprep.subr.mxu0 0.0
        %1118 = vmatpush1.msra.mxu0 %v499
        %1119 = vmatprep.subr.mxu0 0.0
        %1120 = vmatpush1.msra.mxu0 %v500
        %1121 = vmatprep.subr.mxu0 0.0
        %1122 = vmatpush1.msra.mxu0 %v501
        %1123 = vmatprep.subr.mxu0 0.0
        %1124 = vmatpush1.msra.mxu0 %v502
        %1125 = vmatprep.subr.mxu0 0.0
        %1126 = vmatpush1.msra.mxu0 %v503
        %1127 = vmatprep.subr.mxu0 0.0
        %1128 = vmatpush1.msra.mxu0 %v504
        %1129 = vmatprep.subr.mxu0 0.0
        %1130 = vmatpush1.msra.mxu0 %v505
        %1131 = vmatprep.subr.mxu0 0.0
        %1132 = vmatpush1.msra.mxu0 %v506
        %1133 = vmatprep.subr.mxu0 0.0
        %1134 = vmatpush1.msra.mxu0 %v507
        %1135 = vmatprep.subr.mxu0 0.0
        %1136 = vmatpush1.msra.mxu0 %v508
        %1137 = vmatprep.subr.mxu0 0.0
        %1138 = vmatpush1.msra.mxu0 %v509
        %1139 = vmatprep.subr.mxu0 0.0
        %1140 = vmatpush1.msra.mxu0 %v510
        %1141 = vmatprep.subr.mxu0 0.0
        %1142 = vmatpush1.msra.mxu0 %v511
        %1143 = vmatprep.subr.mxu0 0.0
        %1144 = vmatpush1.msra.mxu0 %v512
        %1145 = vmatprep.subr.mxu0 0.0
        %1146 = vmatpush1.msra.mxu0 %v513
        %1147 = vmatprep.subr.mxu0 0.0
        %1148 = vmatpush1.msra.mxu0 0.0
        %1149 = vmatprep.subr.mxu0 0.0
        %1150 = vmatpush1.msra.mxu0 0.0
        %1151 = vmatprep.subr.mxu0 0.0
        %1152 = vmatpush1.msra.mxu0 0.0
        %1153 = vmatprep.subr.mxu0 0.0
        %1154 = vmatpush1.msra.mxu0 0.0
        %1155 = vmatprep.subr.mxu0 0.0
        %1156 = vmatpush1.msra.mxu0 0.0
        %1157 = vmatprep.subr.mxu0 0.0
        %1158 = vmatpush1.msra.mxu0 0.0
        %1159 = vmatprep.subr.mxu0 0.0
        %1160 = vmatpush1.msra.mxu0 0.0
        %1161 = vmatprep.subr.mxu0 0.0
        %1162 = vmatpush1.msra.mxu0 0.0
        %1163 = vmatprep.subr.mxu0 0.0
        %1164 = vmatpush1.msra.mxu0 0.0
        %1165 = vmatprep.subr.mxu0 0.0
        %1166 = vmatpush1.msra.mxu0 0.0
        %1167 = vmatprep.subr.mxu0 0.0
        %1168 = vmatpush1.msra.mxu0 0.0
        %1169 = vmatprep.subr.mxu0 0.0
        %1170 = vmatpush1.msra.mxu0 0.0
        %1171 = vmatprep.subr.mxu0 0.0
        %1172 = vmatpush1.msra.mxu0 0.0
        %1173 = vmatprep.subr.mxu0 0.0
        %1174 = vmatpush1.msra.mxu0 0.0
        %1175 = vmatprep.subr.mxu0 0.0
        %1176 = vmatpush1.msra.mxu0 0.0
        %1177 = vmatprep.subr.mxu0 0.0
        %1178 = vmatpush1.msra.mxu0 0.0
        %1179 = vmatprep.mubr.f32.mxu0 0.0
        %1180 = vmatmul.mubr.f32.gmra.mrb[0].mxu0 %v875
        %v1181 = vpop.f32.mrb[0].mxu0
        %v1182 = vadd.f32 0.0, %v1181
        %v1183 = vpop.f32.mrb[0].mxu0
        %1184 = vmatprep.mubr.f32.mxu0 0.0
        %1185 = vmatmul.mubr.f32.gmra.mrb[0].mxu0 %v877
        %v1186 = vpop.f32.mrb[0].mxu0
        %v1187 = vadd.f32 0.0, %v1186
        %v1188 = vpop.f32.mrb[0].mxu0
        %1189 = vmatprep.mubr.f32.mxu0 0.0
        %1190 = vmatmul.mubr.f32.gmra.mrb[0].mxu0 %v879
        %v1191 = vpop.f32.mrb[0].mxu0
        %v1192 = vadd.f32 0.0, %v1191
        %v1193 = vpop.f32.mrb[0].mxu0
        %1194 = vmatprep.mubr.f32.mxu0 0.0
        %1195 = vmatmul.mubr.f32.gmra.mrb[0].mxu0 %v881
        %v1196 = vpop.f32.mrb[0].mxu0
        %v1197 = vadd.f32 0.0, %v1196
        %v1198 = vpop.f32.mrb[0].mxu0
        %1199 = vmatprep.mubr.f32.mxu0 0.0
        %1200 = vmatmul.mubr.f32.gmra.mrb[0].mxu0 %v883
        %v1201 = vpop.f32.mrb[0].mxu0
        %v1202 = vadd.f32 0.0, %v1201
        %v1203 = vpop.f32.mrb[0].mxu0
        %1204 = vmatprep.mubr.f32.mxu0 0.0
        %1205 = vmatmul.mubr.f32.gmra.mrb[0].mxu0 %v885
        %v1206 = vpop.f32.mrb[0].mxu0
        %v1207 = vadd.f32 0.0, %v1206
        %v1208 = vpop.f32.mrb[0].mxu0
        %1209 = vmatprep.mubr.f32.mxu0 0.0
        %1210 = vmatmul.mubr.f32.gmra.mrb[0].mxu0 %v887
        %v1211 = vpop.f32.mrb[0].mxu0
        %v1212 = vadd.f32 0.0, %v1211
        %v1213 = vpop.f32.mrb[0].mxu0
        %1214 = vmatprep.mubr.f32.mxu0 0.0
        %1215 = vmatmul.mubr.f32.gmra.mrb[0].mxu0 %v889
        %v1216 = vpop.f32.mrb[0].mxu0
        %v1217 = vadd.f32 0.0, %v1216
        %v1218 = vpop.f32.mrb[0].mxu0
        %1219 = vmatprep.mubr.f32.mxu0 0.0
        %1220 = vmatmul.mubr.f32.gmra.mrb[0].mxu0 %v891
        %v1221 = vpop.f32.mrb[0].mxu0
        %v1222 = vadd.f32 0.0, %v1221
        %v1223 = vpop.f32.mrb[0].mxu0
        %1224 = vmatprep.mubr.f32.mxu0 0.0
        %1225 = vmatmul.mubr.f32.gmra.mrb[0].mxu0 %v893
        %v1226 = vpop.f32.mrb[0].mxu0
        %v1227 = vadd.f32 0.0, %v1226
        %v1228 = vpop.f32.mrb[0].mxu0
        %1229 = vmatprep.mubr.f32.mxu0 0.0
        %1230 = vmatmul.mubr.f32.gmra.mrb[0].mxu0 %v895
        %v1231 = vpop.f32.mrb[0].mxu0
        %v1232 = vadd.f32 0.0, %v1231
        %v1233 = vpop.f32.mrb[0].mxu0
        %1234 = vmatprep.mubr.f32.mxu0 0.0
        %1235 = vmatmul.mubr.f32.gmra.mrb[0].mxu0 %v897
        %v1236 = vpop.f32.mrb[0].mxu0
        %v1237 = vadd.f32 0.0, %v1236
        %v1238 = vpop.f32.mrb[0].mxu0
        %1239 = vmatprep.mubr.f32.mxu0 0.0
        %1240 = vmatmul.mubr.f32.gmra.mrb[0].mxu0 %v899
        %v1241 = vpop.f32.mrb[0].mxu0
        %v1242 = vadd.f32 0.0, %v1241
        %v1243 = vpop.f32.mrb[0].mxu0
        %1244 = vmatprep.mubr.f32.mxu0 0.0
        %1245 = vmatmul.mubr.f32.gmra.mrb[0].mxu0 %v901
        %v1246 = vpop.f32.mrb[0].mxu0
        %v1247 = vadd.f32 0.0, %v1246
        %v1248 = vpop.f32.mrb[0].mxu0
        %1249 = vmatprep.mubr.f32.mxu0 0.0
        %1250 = vmatmul.mubr.f32.gmra.mrb[0].mxu0 %v903
        %v1251 = vpop.f32.mrb[0].mxu0
        %v1252 = vadd.f32 0.0, %v1251
        %v1253 = vpop.f32.mrb[0].mxu0
        %1254 = vmatprep.mubr.f32.mxu0 0.0
        %1255 = vmatmul.mubr.f32.gmra.mrb[0].mxu0 %v905
        %v1256 = vpop.f32.mrb[0].mxu0
        %v1257 = vadd.f32 0.0, %v1256
        %v1258 = vpop.f32.mrb[0].mxu0
        %1259 = vdwg.mxu0
        %v1260 = vadd.f32 %v1099, %v1182
        %v1261 = vadd.f32 %v1100, %v1187
        %v1262 = vadd.f32 %v1101, %v1192
        %v1263 = vadd.f32 %v1102, %v1197
        %v1264 = vadd.f32 %v1103, %v1202
        %v1265 = vadd.f32 %v1104, %v1207
        %v1266 = vadd.f32 %v1105, %v1212
        %v1267 = vadd.f32 %v1106, %v1217
        %v1268 = vadd.f32 %v1107, %v1222
        %v1269 = vadd.f32 %v1108, %v1227
        %v1270 = vadd.f32 %v1109, %v1232
        %v1271 = vadd.f32 %v1110, %v1237
        %v1272 = vadd.f32 %v1111, %v1242
        %v1273 = vadd.f32 %v1112, %v1247
        %v1274 = vadd.f32 %v1113, %v1252
        %v1275 = vadd.f32 %v1114, %v1257
        %1276 = vst [vmem:[#allocation4] sm:$0xff] %v1260
        %1277 = vst [vmem:[#allocation4 + $0x8] sm:$0xff] %v1261
        %1278 = vst [vmem:[#allocation4 + $0x10] sm:$0xff] %v1262
        %1279 = vst [vmem:[#allocation4 + $0x18] sm:$0xff] %v1263
        %1280 = vst [vmem:[#allocation4 + $0x20] sm:$0xff] %v1264
        %1281 = vst [vmem:[#allocation4 + $0x28] sm:$0xff] %v1265
        %1282 = vst [vmem:[#allocation4 + $0x30] sm:$0xff] %v1266
        %1283 = vst [vmem:[#allocation4 + $0x38] sm:$0xff] %v1267
        %1284 = vst [vmem:[#allocation4 + $0x40] sm:$0xff] %v1268
        %1285 = vst [vmem:[#allocation4 + $0x48] sm:$0xff] %v1269
        %1286 = vst [vmem:[#allocation4 + $0x50] sm:$0xff] %v1270
        %1287 = vst [vmem:[#allocation4 + $0x58] sm:$0xff] %v1271
        %1288 = vst [vmem:[#allocation4 + $0x60] sm:$0xff] %v1272
        %1289 = vst [vmem:[#allocation4 + $0x68] sm:$0xff] %v1273
        %1290 = vst [vmem:[#allocation4 + $0x70] sm:$0xff] %v1274
        %1291 = vst [vmem:[#allocation4 + $0x78] sm:$0xff] %v1275
        %1292 = vst.msk [vmem:[#allocation2] sm:$0xff] %vm986, %v714
        %1293 = vst.msk [vmem:[#allocation2 + $0x8] sm:$0xff] %vm986, %v715
        %1294 = vst.msk [vmem:[#allocation2 + $0x10] sm:$0xff] %vm986, %v716
        %1295 = vst.msk [vmem:[#allocation2 + $0x18] sm:$0xff] %vm986, %v717
        %1296 = vst.msk [vmem:[#allocation2 + $0x20] sm:$0xff] %vm986, %v718
        %1297 = vst.msk [vmem:[#allocation2 + $0x28] sm:$0xff] %vm986, %v719
        %1298 = vst.msk [vmem:[#allocation2 + $0x30] sm:$0xff] %vm986, %v720
        %1299 = vst.msk [vmem:[#allocation2 + $0x38] sm:$0xff] %vm986, %v721
        %1300 = vst.msk [vmem:[#allocation2 + $0x40] sm:$0xff] %vm986, %v722
        %1301 = vst.msk [vmem:[#allocation2 + $0x48] sm:$0xff] %vm986, %v723
        %1302 = vst.msk [vmem:[#allocation2 + $0x50] sm:$0xff] %vm986, %v724
        %1303 = vst.msk [vmem:[#allocation2 + $0x58] sm:$0xff] %vm986, %v725
        %1304 = vst.msk [vmem:[#allocation2 + $0x60] sm:$0xff] %vm986, %v726
        %1305 = vst.msk [vmem:[#allocation2 + $0x68] sm:$0xff] %vm986, %v727
        %1306 = vst.msk [vmem:[#allocation2 + $0x70] sm:$0xff] %vm986, %v728
        %1307 = vst.msk [vmem:[#allocation2 + $0x78] sm:$0xff] %vm986, %v729
        // Predicated region
        $region65: #{tpu_custom_call.1} parent=43 // pred_check
          %p1308 = pneg %p413
        $region66: #{tpu_custom_call.1} parent=43 // pred_check_branch
          %1310 = sbr.rel (%p1308) target = $region68
        $region67: #{tpu_custom_call.1} parent=43 // pred_region
          %v1311 = vld [vmem:[#allocation4] sm:$0xff]
          %v1312 = vld [vmem:[#allocation4 + $0x8] sm:$0xff]
          %v1313 = vld [vmem:[#allocation4 + $0x10] sm:$0xff]
          %v1314 = vld [vmem:[#allocation4 + $0x18] sm:$0xff]
          %v1315 = vld [vmem:[#allocation4 + $0x20] sm:$0xff]
          %v1316 = vld [vmem:[#allocation4 + $0x28] sm:$0xff]
          %v1317 = vld [vmem:[#allocation4 + $0x30] sm:$0xff]
          %v1318 = vld [vmem:[#allocation4 + $0x38] sm:$0xff]
          %v1319 = vld [vmem:[#allocation4 + $0x40] sm:$0xff]
          %v1320 = vld [vmem:[#allocation4 + $0x48] sm:$0xff]
          %v1321 = vld [vmem:[#allocation4 + $0x50] sm:$0xff]
          %v1322 = vld [vmem:[#allocation4 + $0x58] sm:$0xff]
          %v1323 = vld [vmem:[#allocation4 + $0x60] sm:$0xff]
          %v1324 = vld [vmem:[#allocation4 + $0x68] sm:$0xff]
          %v1325 = vld [vmem:[#allocation4 + $0x70] sm:$0xff]
          %v1326 = vld [vmem:[#allocation4 + $0x78] sm:$0xff]
          %v1327 = vld [vmem:[#allocation3] sm:$0xff]
          %v1328 = vld [vmem:[#allocation3 + $0x8] sm:$0xff]
          %v1329 = vld [vmem:[#allocation3 + $0x10] sm:$0xff]
          %v1330 = vld [vmem:[#allocation3 + $0x18] sm:$0xff]
          %v1331 = vld [vmem:[#allocation3 + $0x20] sm:$0xff]
          %v1332 = vld [vmem:[#allocation3 + $0x28] sm:$0xff]
          %v1333 = vld [vmem:[#allocation3 + $0x30] sm:$0xff]
          %v1334 = vld [vmem:[#allocation3 + $0x38] sm:$0xff]
          %v1335 = vld [vmem:[#allocation3 + $0x40] sm:$0xff]
          %v1336 = vld [vmem:[#allocation3 + $0x48] sm:$0xff]
          %v1337 = vld [vmem:[#allocation3 + $0x50] sm:$0xff]
          %v1338 = vld [vmem:[#allocation3 + $0x58] sm:$0xff]
          %v1339 = vld [vmem:[#allocation3 + $0x60] sm:$0xff]
          %v1340 = vld [vmem:[#allocation3 + $0x68] sm:$0xff]
          %v1341 = vld [vmem:[#allocation3 + $0x70] sm:$0xff]
          %v1342 = vld [vmem:[#allocation3 + $0x78] sm:$0xff]
          %v1343 = vrcp.pop %v1327
          %v1344 = vrcp.pop %v1328
          %v1345 = vrcp.pop %v1329
          %v1346 = vrcp.pop %v1330
          %v1347 = vrcp.pop %v1331
          %v1348 = vrcp.pop %v1332
          %v1349 = vrcp.pop %v1333
          %v1350 = vrcp.pop %v1334
          %v1351 = vrcp.pop %v1335
          %v1352 = vrcp.pop %v1336
          %v1353 = vrcp.pop %v1337
          %v1354 = vrcp.pop %v1338
          %v1355 = vrcp.pop %v1339
          %v1356 = vrcp.pop %v1340
          %v1357 = vrcp.pop %v1341
          %v1358 = vrcp.pop %v1342
          %1360 = vset.pattern.permute.xlu0 0
          %1361 = vperm.xlu0 %1360, %v1343
          %v1362 = vpop.permute.xlu0 %1361
          %1365 = vset.pattern.permute.xlu0 0
          %1366 = vperm.xlu0 %1365, %v1344
          %v1367 = vpop.permute.xlu0 %1366
          %1370 = vset.pattern.permute.xlu0 0
          %1371 = vperm.xlu0 %1370, %v1345
          %v1372 = vpop.permute.xlu0 %1371
          %1375 = vset.pattern.permute.xlu0 0
          %1376 = vperm.xlu0 %1375, %v1346
          %v1377 = vpop.permute.xlu0 %1376
          %1380 = vset.pattern.permute.xlu0 0
          %1381 = vperm.xlu0 %1380, %v1347
          %v1382 = vpop.permute.xlu0 %1381
          %1385 = vset.pattern.permute.xlu0 0
          %1386 = vperm.xlu0 %1385, %v1348
          %v1387 = vpop.permute.xlu0 %1386
          %1390 = vset.pattern.permute.xlu0 0
          %1391 = vperm.xlu0 %1390, %v1349
          %v1392 = vpop.permute.xlu0 %1391
          %1395 = vset.pattern.permute.xlu0 0
          %1396 = vperm.xlu0 %1395, %v1350
          %v1397 = vpop.permute.xlu0 %1396
          %1400 = vset.pattern.permute.xlu0 0
          %1401 = vperm.xlu0 %1400, %v1351
          %v1402 = vpop.permute.xlu0 %1401
          %1405 = vset.pattern.permute.xlu0 0
          %1406 = vperm.xlu0 %1405, %v1352
          %v1407 = vpop.permute.xlu0 %1406
          %1410 = vset.pattern.permute.xlu0 0
          %1411 = vperm.xlu0 %1410, %v1353
          %v1412 = vpop.permute.xlu0 %1411
          %1415 = vset.pattern.permute.xlu0 0
          %1416 = vperm.xlu0 %1415, %v1354
          %v1417 = vpop.permute.xlu0 %1416
          %1420 = vset.pattern.permute.xlu0 0
          %1421 = vperm.xlu0 %1420, %v1355
          %v1422 = vpop.permute.xlu0 %1421
          %1425 = vset.pattern.permute.xlu0 0
          %1426 = vperm.xlu0 %1425, %v1356
          %v1427 = vpop.permute.xlu0 %1426
          %1430 = vset.pattern.permute.xlu0 0
          %1431 = vperm.xlu0 %1430, %v1357
          %v1432 = vpop.permute.xlu0 %1431
          %1435 = vset.pattern.permute.xlu0 0
          %1436 = vperm.xlu0 %1435, %v1358
          %v1437 = vpop.permute.xlu0 %1436
          %v1439 = vmul.f32 %v1311, %v1362
          %v1440 = vmul.f32 %v1312, %v1367
          %v1441 = vmul.f32 %v1313, %v1372
          %v1442 = vmul.f32 %v1314, %v1377
          %v1443 = vmul.f32 %v1315, %v1382
          %v1444 = vmul.f32 %v1316, %v1387
          %v1445 = vmul.f32 %v1317, %v1392
          %v1446 = vmul.f32 %v1318, %v1397
          %v1447 = vmul.f32 %v1319, %v1402
          %v1448 = vmul.f32 %v1320, %v1407
          %v1449 = vmul.f32 %v1321, %v1412
          %v1450 = vmul.f32 %v1322, %v1417
          %v1451 = vmul.f32 %v1323, %v1422
          %v1452 = vmul.f32 %v1324, %v1427
          %v1453 = vmul.f32 %v1325, %v1432
          %v1454 = vmul.f32 %v1326, %v1437
          %v1455 = vld [vmem:[#allocation11] sm:$0xff]
          %v1456 = vld [vmem:[#allocation11 + $0x8] sm:$0xff]
          %v1457 = vld [vmem:[#allocation11 + $0x10] sm:$0xff]
          %v1458 = vld [vmem:[#allocation11 + $0x18] sm:$0xff]
          %v1459 = vld [vmem:[#allocation11 + $0x20] sm:$0xff]
          %v1460 = vld [vmem:[#allocation11 + $0x28] sm:$0xff]
          %v1461 = vld [vmem:[#allocation11 + $0x30] sm:$0xff]
          %v1462 = vld [vmem:[#allocation11 + $0x38] sm:$0xff]
          %v1463 = vld [vmem:[#allocation11 + $0x40] sm:$0xff]
          %v1464 = vld [vmem:[#allocation11 + $0x48] sm:$0xff]
          %v1465 = vld [vmem:[#allocation11 + $0x50] sm:$0xff]
          %v1466 = vld [vmem:[#allocation11 + $0x58] sm:$0xff]
          %v1467 = vld [vmem:[#allocation11 + $0x60] sm:$0xff]
          %v1468 = vld [vmem:[#allocation11 + $0x68] sm:$0xff]
          %v1469 = vld [vmem:[#allocation11 + $0x70] sm:$0xff]
          %v1470 = vld [vmem:[#allocation11 + $0x78] sm:$0xff]
          %v1471 = vld [vmem:[%s5] sm:$0x1]
          %v1473 = vlaneseq
          %v1474 = vshrl.u32 %v1473, 7
          %v1475 = vsub.s32 0, %v1474
          %v1476 = vrot.slane %v1471, %v1475
          %1478 = vmatprep.subr.mxu0 0.0
          %1479 = vmatpush1.msra.mxu0 %v1455
          %1480 = vmatprep.subr.mxu0 0.0
          %1481 = vmatpush1.msra.mxu0 %v1456
          %1482 = vmatprep.subr.mxu0 0.0
          %1483 = vmatpush1.msra.mxu0 %v1457
          %1484 = vmatprep.subr.mxu0 0.0
          %1485 = vmatpush1.msra.mxu0 %v1458
          %1486 = vmatprep.subr.mxu0 0.0
          %1487 = vmatpush1.msra.mxu0 %v1459
          %1488 = vmatprep.subr.mxu0 0.0
          %1489 = vmatpush1.msra.mxu0 %v1460
          %1490 = vmatprep.subr.mxu0 0.0
          %1491 = vmatpush1.msra.mxu0 %v1461
          %1492 = vmatprep.subr.mxu0 0.0
          %1493 = vmatpush1.msra.mxu0 %v1462
          %1494 = vmatprep.subr.mxu0 0.0
          %1495 = vmatpush1.msra.mxu0 %v1463
          %1496 = vmatprep.subr.mxu0 0.0
          %1497 = vmatpush1.msra.mxu0 %v1464
          %1498 = vmatprep.subr.mxu0 0.0
          %1499 = vmatpush1.msra.mxu0 %v1465
          %1500 = vmatprep.subr.mxu0 0.0
          %1501 = vmatpush1.msra.mxu0 %v1466
          %1502 = vmatprep.subr.mxu0 0.0
          %1503 = vmatpush1.msra.mxu0 %v1467
          %1504 = vmatprep.subr.mxu0 0.0
          %1505 = vmatpush1.msra.mxu0 %v1468
          %1506 = vmatprep.subr.mxu0 0.0
          %1507 = vmatpush1.msra.mxu0 %v1469
          %1508 = vmatprep.subr.mxu0 0.0
          %1509 = vmatpush1.msra.mxu0 %v1470
          %1510 = vmatprep.subr.mxu0 0.0
          %1511 = vmatpush1.msra.mxu0 0.0
          %1512 = vmatprep.subr.mxu0 0.0
          %1513 = vmatpush1.msra.mxu0 0.0
          %1514 = vmatprep.subr.mxu0 0.0
          %1515 = vmatpush1.msra.mxu0 0.0
          %1516 = vmatprep.subr.mxu0 0.0
          %1517 = vmatpush1.msra.mxu0 0.0
          %1518 = vmatprep.subr.mxu0 0.0
          %1519 = vmatpush1.msra.mxu0 0.0
          %1520 = vmatprep.subr.mxu0 0.0
          %1521 = vmatpush1.msra.mxu0 0.0
          %1522 = vmatprep.subr.mxu0 0.0
          %1523 = vmatpush1.msra.mxu0 0.0
          %1524 = vmatprep.subr.mxu0 0.0
          %1525 = vmatpush1.msra.mxu0 0.0
          %1526 = vmatprep.subr.mxu0 0.0
          %1527 = vmatpush1.msra.mxu0 0.0
          %1528 = vmatprep.subr.mxu0 0.0
          %1529 = vmatpush1.msra.mxu0 0.0
          %1530 = vmatprep.subr.mxu0 0.0
          %1531 = vmatpush1.msra.mxu0 0.0
          %1532 = vmatprep.subr.mxu0 0.0
          %1533 = vmatpush1.msra.mxu0 0.0
          %1534 = vmatprep.subr.mxu0 0.0
          %1535 = vmatpush1.msra.mxu0 0.0
          %1536 = vmatprep.subr.mxu0 0.0
          %1537 = vmatpush1.msra.mxu0 0.0
          %1538 = vmatprep.subr.mxu0 0.0
          %1539 = vmatpush1.msra.mxu0 0.0
          %1540 = vmatprep.subr.mxu0 0.0
          %1541 = vmatpush1.msra.mxu0 0.0
          %1542 = vmatprep.mubr.f32.mxu0 0.0
          %1543 = vmatmul.mubr.f32.gmra.mrb[0].mxu0 %v1439
          %v1544 = vpop.f32.mrb[0].mxu0
          %v1545 = vadd.f32 %v1476, %v1544
          %v1546 = vpop.f32.mrb[0].mxu0
          %1547 = vmatprep.mubr.f32.mxu0 0.0
          %1548 = vmatmul.mubr.f32.gmra.mrb[0].mxu0 %v1440
          %v1549 = vpop.f32.mrb[0].mxu0
          %v1550 = vadd.f32 %v1476, %v1549
          %v1551 = vpop.f32.mrb[0].mxu0
          %1552 = vmatprep.mubr.f32.mxu0 0.0
          %1553 = vmatmul.mubr.f32.gmra.mrb[0].mxu0 %v1441
          %v1554 = vpop.f32.mrb[0].mxu0
          %v1555 = vadd.f32 %v1476, %v1554
          %v1556 = vpop.f32.mrb[0].mxu0
          %1557 = vmatprep.mubr.f32.mxu0 0.0
          %1558 = vmatmul.mubr.f32.gmra.mrb[0].mxu0 %v1442
          %v1559 = vpop.f32.mrb[0].mxu0
          %v1560 = vadd.f32 %v1476, %v1559
          %v1561 = vpop.f32.mrb[0].mxu0
          %1562 = vmatprep.mubr.f32.mxu0 0.0
          %1563 = vmatmul.mubr.f32.gmra.mrb[0].mxu0 %v1443
          %v1564 = vpop.f32.mrb[0].mxu0
          %v1565 = vadd.f32 %v1476, %v1564
          %v1566 = vpop.f32.mrb[0].mxu0
          %1567 = vmatprep.mubr.f32.mxu0 0.0
          %1568 = vmatmul.mubr.f32.gmra.mrb[0].mxu0 %v1444
          %v1569 = vpop.f32.mrb[0].mxu0
          %v1570 = vadd.f32 %v1476, %v1569
          %v1571 = vpop.f32.mrb[0].mxu0
          %1572 = vmatprep.mubr.f32.mxu0 0.0
          %1573 = vmatmul.mubr.f32.gmra.mrb[0].mxu0 %v1445
          %v1574 = vpop.f32.mrb[0].mxu0
          %v1575 = vadd.f32 %v1476, %v1574
          %v1576 = vpop.f32.mrb[0].mxu0
          %1577 = vmatprep.mubr.f32.mxu0 0.0
          %1578 = vmatmul.mubr.f32.gmra.mrb[0].mxu0 %v1446
          %v1579 = vpop.f32.mrb[0].mxu0
          %v1580 = vadd.f32 %v1476, %v1579
          %v1581 = vpop.f32.mrb[0].mxu0
          %1582 = vmatprep.mubr.f32.mxu0 0.0
          %1583 = vmatmul.mubr.f32.gmra.mrb[0].mxu0 %v1447
          %v1584 = vpop.f32.mrb[0].mxu0
          %v1585 = vadd.f32 %v1476, %v1584
          %v1586 = vpop.f32.mrb[0].mxu0
          %1587 = vmatprep.mubr.f32.mxu0 0.0
          %1588 = vmatmul.mubr.f32.gmra.mrb[0].mxu0 %v1448
          %v1589 = vpop.f32.mrb[0].mxu0
          %v1590 = vadd.f32 %v1476, %v1589
          %v1591 = vpop.f32.mrb[0].mxu0
          %1592 = vmatprep.mubr.f32.mxu0 0.0
          %1593 = vmatmul.mubr.f32.gmra.mrb[0].mxu0 %v1449
          %v1594 = vpop.f32.mrb[0].mxu0
          %v1595 = vadd.f32 %v1476, %v1594
          %v1596 = vpop.f32.mrb[0].mxu0
          %1597 = vmatprep.mubr.f32.mxu0 0.0
          %1598 = vmatmul.mubr.f32.gmra.mrb[0].mxu0 %v1450
          %v1599 = vpop.f32.mrb[0].mxu0
          %v1600 = vadd.f32 %v1476, %v1599
          %v1601 = vpop.f32.mrb[0].mxu0
          %1602 = vmatprep.mubr.f32.mxu0 0.0
          %1603 = vmatmul.mubr.f32.gmra.mrb[0].mxu0 %v1451
          %v1604 = vpop.f32.mrb[0].mxu0
          %v1605 = vadd.f32 %v1476, %v1604
          %v1606 = vpop.f32.mrb[0].mxu0
          %1607 = vmatprep.mubr.f32.mxu0 0.0
          %1608 = vmatmul.mubr.f32.gmra.mrb[0].mxu0 %v1452
          %v1609 = vpop.f32.mrb[0].mxu0
          %v1610 = vadd.f32 %v1476, %v1609
          %v1611 = vpop.f32.mrb[0].mxu0
          %1612 = vmatprep.mubr.f32.mxu0 0.0
          %1613 = vmatmul.mubr.f32.gmra.mrb[0].mxu0 %v1453
          %v1614 = vpop.f32.mrb[0].mxu0
          %v1615 = vadd.f32 %v1476, %v1614
          %v1616 = vpop.f32.mrb[0].mxu0
          %1617 = vmatprep.mubr.f32.mxu0 0.0
          %1618 = vmatmul.mubr.f32.gmra.mrb[0].mxu0 %v1454
          %v1619 = vpop.f32.mrb[0].mxu0
          %v1620 = vadd.f32 %v1476, %v1619
          %v1621 = vpop.f32.mrb[0].mxu0
          %1622 = vdwg.mxu0
          %1623 = vst [vmem:[%s405] sm:$0xff] %v1545
          %1624 = vst [vmem:[%s405 + $0x8] sm:$0xff] %v1550
          %1625 = vst [vmem:[%s405 + $0x10] sm:$0xff] %v1555
          %1626 = vst [vmem:[%s405 + $0x18] sm:$0xff] %v1560
          %1627 = vst [vmem:[%s405 + $0x20] sm:$0xff] %v1565
          %1628 = vst [vmem:[%s405 + $0x28] sm:$0xff] %v1570
          %1629 = vst [vmem:[%s405 + $0x30] sm:$0xff] %v1575
          %1630 = vst [vmem:[%s405 + $0x38] sm:$0xff] %v1580
          %1631 = vst [vmem:[%s405 + $0x40] sm:$0xff] %v1585
          %1632 = vst [vmem:[%s405 + $0x48] sm:$0xff] %v1590
          %1633 = vst [vmem:[%s405 + $0x50] sm:$0xff] %v1595
          %1634 = vst [vmem:[%s405 + $0x58] sm:$0xff] %v1600
          %1635 = vst [vmem:[%s405 + $0x60] sm:$0xff] %v1605
          %1636 = vst [vmem:[%s405 + $0x68] sm:$0xff] %v1610
          %1637 = vst [vmem:[%s405 + $0x70] sm:$0xff] %v1615
          %1638 = vst [vmem:[%s405 + $0x78] sm:$0xff] %v1620
        $region68: #{tpu_custom_call.1} parent=43 // pred_fallthru
          _
        %s1639 = sand.u32 %s208, 1
        %s1640 = scalar_lea.sflag [#allocation7], %s1639
        %s1641 = sand.u32 %s208, 1
        %s1642 = smul.addr %s1641, 128
        %s1643 = scalar_lea.vmem [#allocation13], %s1642
        // Predicated region
        $region69: #{tpu_custom_call.1} parent=43 // pred_check
          %p1644 = pneg %p218
        $region70: #{tpu_custom_call.1} parent=43 // pred_check_branch
          %1646 = sbr.rel (%p1644) target = $region72
        $region71: #{tpu_custom_call.1} parent=43 // pred_region
          %s1647 = smul.u32 16, %s33
          %s1649 = ssub.s32 2048, 2048
          %1650 = vsyncadd %s1640, %s1649
          %s1651 = smul.addr %s32, 16
          %s1652 = sadd.s32 %s1647, %s1651
          %s1653 = smul.addr %s1652, 128
          %s1654 = scalar_lea.hbm %s6, %s1653
          %s1655 = sshll.u32 %s1643, 4
          %s1656 = int_to_ptr.vmem [resolvable:$true] %s1655
          %1661 = dma.vmem_to_hbm [thread:$0]  %s1656, 2048, %s1654, %s1640, 128, 128, 8
        $region72: #{tpu_custom_call.1} parent=43 // pred_fallthru
          _
      $region44: #{tpu_custom_call.1} parent=5 // pred_fallthru
        _
      %p1662 = scmp.le.s32.totalorder 2, %s22
      // Predicated region
      $region73: #{tpu_custom_call.1} parent=5 // pred_check
        %p1663 = pneg %p1662
      $region74: #{tpu_custom_call.1} parent=5 // pred_check_branch
        %1665 = sbr.rel (%p1663) target = $region76
      $region75: #{tpu_custom_call.1} parent=5 // pred_region
        %s1666 = ssub.s32 %s22, 2
        // Predicated region
        $region77: #{tpu_custom_call.1} parent=75 // pred_check
          %p1667 = pneg %p224
        $region78: #{tpu_custom_call.1} parent=75 // pred_check_branch
          %1669 = sbr.rel (%p1667) target = $region80
        $region79: #{tpu_custom_call.1} parent=75 // pred_region
          %s1670 = sand.u32 %s209, 1
          %s1671 = scalar_lea.sflag [#allocation7], %s1670
          %s1672 = sand.u32 %s209, 1
          %s1673 = smul.addr %s1672, 128
          %s1674 = scalar_lea.vmem [#allocation13], %s1673
          %1675 = dma.done %s1671, 2048
        $region80: #{tpu_custom_call.1} parent=75 // pred_fallthru
          _
      $region76: #{tpu_custom_call.1} parent=5 // pred_fallthru
        _
    $region6: #{tpu_custom_call.1} parent=1 // loop_footer
      %s26 = sadd.s32 1, %s22
    $region7: #{tpu_custom_call.1} parent=1 // loop_footer_branch
      %21 = sbr.rel target = $region3
    $region8: #{tpu_custom_call.1} parent=1 // loop_exit
      _
    %1676 = vsyncpa [#allocation6], 1
    %s1677 = scalar_lea.sflag [#allocation6], 1
    %1678 = vsyncpa %s1677, 1
    %1679 = vsyncpa [#allocation9], 1
    %s1680 = scalar_lea.sflag [#allocation9], 1
    %1681 = vsyncpa %s1680, 1
    %1682 = vsyncpa [#allocation12], 1
    %1683 = vsyncpa [#allocation7], 1
    %s1684 = scalar_lea.sflag [#allocation7], 1
    %1685 = vsyncpa %s1684, 1

</llo_original>
